<compile_context>
chip_gen: v6e
topology: v6e:2x2x1
jax: 0.10.0
libtpu: 0.0.40
codegen_flags: <defaults>
</compile_context>

<pallas_src>
import math

import jax
import jax.numpy as jnp
from jax import lax
from jax.experimental import pallas as pl
from jax.experimental.pallas import tpu as pltpu

CMID = 256          # hidden channels of the aux head (fixed by the module)
LANE = 128          # TPU lane width
TILE_VMEM_BUDGET = 6 * 1024 * 1024   # per-tile working-set cap (bytes)


def _round_up(x, m):
    return (x + m - 1) // m * m


def _pick_tile_h(H, W, cin, kpad):
    """Largest divisor of H whose per-tile working set fits the VMEM budget,
    with tile_h * W >= 128 (full MXU M dim) when possible."""
    best = None
    for th in range(1, H + 1):
        if H % th != 0:
            continue
        rows = th * W
        # input window + im2col patches (bf16) + f32 acc + double-buffered out
        bytes_est = ((th + 2) * (W + 2) * cin * 2
                     + rows * 9 * cin * 2
                     + rows * CMID * 4
                     + 2 * rows * kpad * 4)
        if (rows >= LANE or th == H) and bytes_est <= TILE_VMEM_BUDGET:
            best = th
    if best is not None:
        return best
    # Fallback: smallest divisor with a full MXU M dim (or the whole image).
    for th in range(1, H + 1):
        if H % th == 0 and th * W >= LANE:
            return th
    return H


def aux_kernel(xp_ref, w1_ref, scale_ref, shift_ref, w2_ref, b2_ref, o_ref):
    # xp_ref:    (H+2, W+2, Cin)   zero-padded NHWC image (one batch elem), bf16
    # w1_ref:    (9*Cin, 256)      3x3 conv weights, im2col layout (kh,kw,ci), bf16
    # scale_ref: (1, 256)          folded BN scale (gamma / sqrt(var+eps)), f32
    # shift_ref: (1, 256)          folded BN shift (beta - mean*scale), f32
    # w2_ref:    (256, Kpad)       1x1 conv weights, classes zero-padded, bf16
    # b2_ref:    (1, Kpad)         1x1 conv bias (zero-padded), f32
    # o_ref:     (tile_h, W, Kpad) output row tile, f32
    t = pl.program_id(1)
    _, _, cin = xp_ref.shape
    tile_h, W, kpad = o_ref.shape

    # This tile's rows plus a 1-row halo on each side.  Dim 0 is a major dim,
    # so the dynamic slice is cheap; the full padded image stays resident in
    # VMEM across the row-tile grid axis (its block index never changes).
    r0 = pl.multiple_of(t * tile_h, tile_h)
    xwin = xp_ref[pl.ds(r0, tile_h + 2), :, :]           # (tile_h+2, W+2, Cin)

    # Full im2col: one fat MXU matmul instead of 9 thin-K ones.
    cols = []
    for kh in range(3):
        for kw in range(3):
            cols.append(
                xwin[kh:kh + tile_h, kw:kw + W, :].reshape(tile_h * W, cin))
    patches = jnp.concatenate(cols, axis=-1)             # (tile_h*W, 9*Cin)

    acc = jnp.dot(patches, w1_ref[...],                  # f32 accumulation
                  preferred_element_type=jnp.float32)    # (tile_h*W, 256)

    # Folded BatchNorm (inference / running stats) + ReLU.
    y = acc * scale_ref[...] + shift_ref[...]
    y = jnp.maximum(y, 0.0).astype(w2_ref.dtype)         # bf16 for the MXU

    # 1x1 conv == (tile_h*W, 256) @ (256, Kpad) + bias; Kpad lanes are dense.
    out = jnp.dot(y, w2_ref[...], preferred_element_type=jnp.float32)
    out = out + b2_ref[...]

    o_ref[...] = out.reshape(tile_h, W, kpad).astype(o_ref.dtype)


def aux_forward(x_nchw, params):
    w1, scale, shift, w2, b2 = params
    N, cin, H, W = x_nchw.shape
    num_classes = w2.shape[-1]
    kpad = _round_up(num_classes, LANE)
    tile_h = _pick_tile_h(H, W, cin, kpad)
    n_tiles = H // tile_h

    # NCHW -> NHWC + spatial zero-pad (padding=1); XLA fuses these into one
    # HBM pass.  Activations go to bf16 (halves HBM/VMEM traffic, bf16 MXU).
    # TODO(synk): for very large activations (v7x 64 MiB VMEM) the padded image
    # should be row-tiled at grid level with explicit halo DMA instead of kept
    # fully resident per batch element.
    x_nhwc = jnp.transpose(x_nchw, (0, 2, 3, 1))
    xp = jnp.pad(x_nhwc, ((0, 0), (1, 1), (1, 1), (0, 0))).astype(jnp.bfloat16)

    # Conv1 weights HWIO (3,3,Cin,256) -> im2col (9*Cin, 256); conv2 weights /
    # bias zero-padded to a lane-dense Kpad.
    w1_col = w1.reshape(9 * cin, CMID).astype(jnp.bfloat16)
    w2_pad = jnp.zeros((CMID, kpad), jnp.bfloat16).at[:, :num_classes].set(
        w2.astype(jnp.bfloat16))
    b2_pad = jnp.zeros((1, kpad), jnp.float32).at[:, :num_classes].set(
        b2.reshape(1, num_classes).astype(jnp.float32))
    scale = scale.reshape(1, CMID).astype(jnp.float32)
    shift = shift.reshape(1, CMID).astype(jnp.float32)

    out_pad = pl.pallas_call(
        aux_kernel,
        out_shape=jax.ShapeDtypeStruct((N, H, W, kpad), jnp.float32),
        grid_spec=pltpu.PrefetchScalarGridSpec(
            num_scalar_prefetch=0,
            grid=(N, n_tiles),
            in_specs=[
                # Full padded image; block index is constant across the
                # row-tile axis so it is fetched once per image.
                pl.BlockSpec((None, H + 2, W + 2, cin),
                             lambda n, t: (n, 0, 0, 0)),
                pl.BlockSpec((9 * cin, CMID), lambda n, t: (0, 0)),
                pl.BlockSpec((1, CMID), lambda n, t: (0, 0)),
                pl.BlockSpec((1, CMID), lambda n, t: (0, 0)),
                pl.BlockSpec((CMID, kpad), lambda n, t: (0, 0)),
                pl.BlockSpec((1, kpad), lambda n, t: (0, 0)),
            ],
            out_specs=pl.BlockSpec((None, tile_h, W, kpad),
                                   lambda n, t: (n, t, 0, 0)),
        ),
        compiler_params=pltpu.CompilerParams(
            dimension_semantics=("parallel", "parallel"),
            vmem_limit_bytes=48 * 1024 * 1024),
    )(xp, w1_col, scale, shift, w2_pad, b2_pad)

    # Slice the real classes back out (tiny tensor) and return NCHW to match
    # PyTorch semantics.
    out = out_pad[..., :num_classes].astype(x_nchw.dtype)
    return jnp.transpose(out, (0, 3, 1, 2))


def init_params(key, in_planes, num_classes=19):
    """Deterministic init mirroring the PyTorch module's parameter shapes."""
    k1, k2, k3 = jax.random.split(key, 3)

    # Conv2d(in_planes, 256, 3) — PyTorch weight (256, Cin, 3, 3) -> HWIO
    bound1 = 1.0 / math.sqrt(in_planes * 9)
    w1 = jax.random.uniform(k1, (3, 3, in_planes, CMID), jnp.float32,
                            -bound1, bound1)

    # BatchNorm2d(256) at init: gamma=1, beta=0, running_mean=0, running_var=1
    # TODO(synk): BN is applied in inference mode (running stats); PyTorch
    # train-mode batch statistics would require a batch-wide reduction pass.
    eps = 1e-5
    gamma = jnp.ones((CMID,), jnp.float32)
    beta = jnp.zeros((CMID,), jnp.float32)
    rmean = jnp.zeros((CMID,), jnp.float32)
    rvar = jnp.ones((CMID,), jnp.float32)
    inv_std = gamma / jnp.sqrt(rvar + eps)
    scale = inv_std.reshape(1, CMID)
    shift = (beta - rmean * inv_std).reshape(1, CMID)

    # Conv2d(256, num_classes, 1) — weight (K, 256, 1, 1) -> (256, K), bias (K,)
    bound2 = 1.0 / math.sqrt(CMID)
    w2 = jax.random.uniform(k2, (CMID, num_classes), jnp.float32,
                            -bound2, bound2)
    b2 = jax.random.uniform(k3, (1, num_classes), jnp.float32,
                            -bound2, bound2)
    return w1, scale, shift, w2, b2


def reference_forward(x_nchw, params):
    """Pure-JAX f32 reference (same math) for a correctness check."""
    w1, scale, shift, w2, b2 = params
    x = jnp.transpose(x_nchw, (0, 2, 3, 1))
    y = lax.conv_general_dilated(
        x, w1, window_strides=(1, 1), padding="SAME",
        dimension_numbers=("NHWC", "HWIO", "NHWC"))
    y = y * scale.reshape(1, 1, 1, -1) + shift.reshape(1, 1, 1, -1)
    y = jnp.maximum(y, 0.0)
    out = jnp.einsum("nhwc,ck->nhwk", y, w2) + b2.reshape(1, 1, 1, -1)
    return jnp.transpose(out, (0, 3, 1, 2))


if __name__ == "__main__":
    key = jax.random.PRNGKey(0)
    kx, kp = jax.random.split(key)

    N, C_IN, H, W = 2, 4, 16, 16
    NUM_CLASSES = 19

    x = jax.random.normal(kx, (N, C_IN, H, W), jnp.float32)
    w1, scale, shift, w2, b2 = init_params(kp, C_IN, NUM_CLASSES)

    # Round the tensors the kernel consumes in bf16 so the f32 reference sees
    # exactly the same values (keeps the comparison tight despite bf16 MXU).
    def bf16_round(a):
        return a.astype(jnp.bfloat16).astype(jnp.float32)

    x = bf16_round(x)
    params = (bf16_round(w1), scale, shift, bf16_round(w2), b2)

    out = jax.block_until_ready(aux_forward(x, params))
    ref = jax.block_until_ready(reference_forward(x, params))

    assert out.shape == (N, NUM_CLASSES, H, W), out.shape
    max_err = float(jnp.max(jnp.abs(out - ref)))
    assert jnp.allclose(out, ref, atol=1e-2, rtol=1e-2), max_err

    print("KERNEL_OK")
</pallas_src>

<mosaic_0001>
module attributes {stable_mosaic.version = 11 : i64} {
  func.func @aux_kernel(%arg0: i32, %arg1: i32, %arg2: memref<1x18x18x4xbf16, #tpu.memory_space<vmem>>, %arg3: memref<36x256xbf16, #tpu.memory_space<vmem>>, %arg4: memref<1x256xf32, #tpu.memory_space<vmem>>, %arg5: memref<1x256xf32, #tpu.memory_space<vmem>>, %arg6: memref<256x128xbf16, #tpu.memory_space<vmem>>, %arg7: memref<1x128xf32, #tpu.memory_space<vmem>>, %arg8: memref<1x16x16x128xf32, #tpu.memory_space<vmem>>) attributes {dimension_semantics = [#tpu.dimension_semantics<parallel>, #tpu.dimension_semantics<parallel>], iteration_bounds = array<i64: 2, 1>, scalar_prefetch = 0 : i64, scratch_operands = 0 : i64, tpu.core_type = #tpu.core_type<tc>, window_params = [{transform_indices = @transform_0, window_bounds = array<i64: 1, 18, 18, 4>}, {pipeline_mode = #tpu.pipeline_mode<synchronous>, transform_indices = @transform_1, window_bounds = array<i64: 36, 256>}, {pipeline_mode = #tpu.pipeline_mode<synchronous>, transform_indices = @transform_2, window_bounds = array<i64: 1, 256>}, {pipeline_mode = #tpu.pipeline_mode<synchronous>, transform_indices = @transform_3, window_bounds = array<i64: 1, 256>}, {pipeline_mode = #tpu.pipeline_mode<synchronous>, transform_indices = @transform_4, window_bounds = array<i64: 256, 128>}, {pipeline_mode = #tpu.pipeline_mode<synchronous>, transform_indices = @transform_5, window_bounds = array<i64: 1, 128>}, {transform_indices = @transform_6, window_bounds = array<i64: 1, 16, 16, 128>}]} {
    %c16_i32 = arith.constant 16 : i32
    %0 = arith.muli %arg1, %c16_i32 : i32
    %1 = tpu.assume_multiple %0, 16 : i32
    %c0 = arith.constant 0 : index
    %2 = arith.index_cast %1 : i32 to index
    %c0_0 = arith.constant 0 : index
    %c0_1 = arith.constant 0 : index
    %3 = vector.load %arg2[%c0, %2, %c0_0, %c0_1] : memref<1x18x18x4xbf16, #tpu.memory_space<vmem>>, vector<1x18x18x4xbf16>
    %4 = vector.shape_cast %3 : vector<1x18x18x4xbf16> to vector<18x18x4xbf16>
    %5 = vector.extract_strided_slice %4 {offsets = [0, 0, 0], sizes = [16, 16, 4], strides = [1, 1, 1]} : vector<18x18x4xbf16> to vector<16x16x4xbf16>
    %6 = vector.shape_cast %5 : vector<16x16x4xbf16> to vector<256x4xbf16>
    %7 = vector.extract_strided_slice %4 {offsets = [0, 1, 0], sizes = [16, 16, 4], strides = [1, 1, 1]} : vector<18x18x4xbf16> to vector<16x16x4xbf16>
    %8 = vector.shape_cast %7 : vector<16x16x4xbf16> to vector<256x4xbf16>
    %9 = vector.extract_strided_slice %4 {offsets = [0, 2, 0], sizes = [16, 16, 4], strides = [1, 1, 1]} : vector<18x18x4xbf16> to vector<16x16x4xbf16>
    %10 = vector.shape_cast %9 : vector<16x16x4xbf16> to vector<256x4xbf16>
    %11 = vector.extract_strided_slice %4 {offsets = [1, 0, 0], sizes = [16, 16, 4], strides = [1, 1, 1]} : vector<18x18x4xbf16> to vector<16x16x4xbf16>
    %12 = vector.shape_cast %11 : vector<16x16x4xbf16> to vector<256x4xbf16>
    %13 = vector.extract_strided_slice %4 {offsets = [1, 1, 0], sizes = [16, 16, 4], strides = [1, 1, 1]} : vector<18x18x4xbf16> to vector<16x16x4xbf16>
    %14 = vector.shape_cast %13 : vector<16x16x4xbf16> to vector<256x4xbf16>
    %15 = vector.extract_strided_slice %4 {offsets = [1, 2, 0], sizes = [16, 16, 4], strides = [1, 1, 1]} : vector<18x18x4xbf16> to vector<16x16x4xbf16>
    %16 = vector.shape_cast %15 : vector<16x16x4xbf16> to vector<256x4xbf16>
    %17 = vector.extract_strided_slice %4 {offsets = [2, 0, 0], sizes = [16, 16, 4], strides = [1, 1, 1]} : vector<18x18x4xbf16> to vector<16x16x4xbf16>
    %18 = vector.shape_cast %17 : vector<16x16x4xbf16> to vector<256x4xbf16>
    %19 = vector.extract_strided_slice %4 {offsets = [2, 1, 0], sizes = [16, 16, 4], strides = [1, 1, 1]} : vector<18x18x4xbf16> to vector<16x16x4xbf16>
    %20 = vector.shape_cast %19 : vector<16x16x4xbf16> to vector<256x4xbf16>
    %21 = vector.extract_strided_slice %4 {offsets = [2, 2, 0], sizes = [16, 16, 4], strides = [1, 1, 1]} : vector<18x18x4xbf16> to vector<16x16x4xbf16>
    %22 = vector.shape_cast %21 : vector<16x16x4xbf16> to vector<256x4xbf16>
    %23 = tpu.concatenate %6, %8, %10, %12, %14, %16, %18, %20, %22 in 1 : vector<256x4xbf16>, vector<256x4xbf16>, vector<256x4xbf16>, vector<256x4xbf16>, vector<256x4xbf16>, vector<256x4xbf16>, vector<256x4xbf16>, vector<256x4xbf16>, vector<256x4xbf16> -> vector<256x36xbf16>
    %c0_2 = arith.constant 0 : index
    %c0_3 = arith.constant 0 : index
    %24 = vector.load %arg3[%c0_2, %c0_3] : memref<36x256xbf16, #tpu.memory_space<vmem>>, vector<36x256xbf16>
    %cst = arith.constant dense<0.000000e+00> : vector<256x256xf32>
    %25 = tpu.matmul %23, %24, %cst {dimension_numbers = #tpu.dot_dimension_numbers<[1], [0], [0], [1], [0, 0, 1, 1], [], []>} : vector<256x36xbf16>, vector<36x256xbf16>, vector<256x256xf32> -> vector<256x256xf32>
    %c0_4 = arith.constant 0 : index
    %c0_5 = arith.constant 0 : index
    %26 = vector.load %arg4[%c0_4, %c0_5] : memref<1x256xf32, #tpu.memory_space<vmem>>, vector<1x256xf32>
    %27 = vector.broadcast %26 : vector<1x256xf32> to vector<256x256xf32>
    %28 = arith.mulf %25, %27 : vector<256x256xf32>
    %c0_6 = arith.constant 0 : index
    %c0_7 = arith.constant 0 : index
    %29 = vector.load %arg5[%c0_6, %c0_7] : memref<1x256xf32, #tpu.memory_space<vmem>>, vector<1x256xf32>
    %30 = vector.broadcast %29 : vector<1x256xf32> to vector<256x256xf32>
    %31 = arith.addf %28, %30 : vector<256x256xf32>
    %cst_8 = arith.constant 0.000000e+00 : f32
    %32 = vector.broadcast %cst_8 : f32 to vector<256x256xf32>
    %33 = arith.maximumf %31, %32 : vector<256x256xf32>
    %34 = arith.truncf %33 : vector<256x256xf32> to vector<256x256xbf16>
    %c0_9 = arith.constant 0 : index
    %c0_10 = arith.constant 0 : index
    %35 = vector.load %arg6[%c0_9, %c0_10] : memref<256x128xbf16, #tpu.memory_space<vmem>>, vector<256x128xbf16>
    %cst_11 = arith.constant dense<0.000000e+00> : vector<256x128xf32>
    %36 = tpu.matmul %34, %35, %cst_11 {dimension_numbers = #tpu.dot_dimension_numbers<[1], [0], [0], [1], [0, 0, 1, 1], [], []>} : vector<256x256xbf16>, vector<256x128xbf16>, vector<256x128xf32> -> vector<256x128xf32>
    %c0_12 = arith.constant 0 : index
    %c0_13 = arith.constant 0 : index
    %37 = vector.load %arg7[%c0_12, %c0_13] : memref<1x128xf32, #tpu.memory_space<vmem>>, vector<1x128xf32>
    %38 = vector.broadcast %37 : vector<1x128xf32> to vector<256x128xf32>
    %39 = arith.addf %36, %38 : vector<256x128xf32>
    %40 = vector.shape_cast %39 : vector<256x128xf32> to vector<16x16x128xf32>
    %c0_14 = arith.constant 0 : index
    %c0_15 = arith.constant 0 : index
    %c0_16 = arith.constant 0 : index
    %c0_17 = arith.constant 0 : index
    %41 = vector.load %arg8[%c0_14, %c0_15, %c0_16, %c0_17] : memref<1x16x16x128xf32, #tpu.memory_space<vmem>>, vector<1x16x16x128xf32>
    %42 = vector.shape_cast %41 : vector<1x16x16x128xf32> to vector<16x16x128xf32>
    %43 = vector.shape_cast %40 : vector<16x16x128xf32> to vector<1x16x16x128xf32>
    tpu.vector_store %arg8[%c0_14, %c0_15, %c0_16, %c0_17], %43 {strides = array<i32>} : memref<1x16x16x128xf32, #tpu.memory_space<vmem>>, vector<1x16x16x128xf32>,
    return
  }
  func.func @transform_0(%arg0: i32, %arg1: i32) -> (i32, i32, i32, i32) {
    %c0_i32 = arith.constant 0 : i32
    %c0_i32_0 = arith.constant 0 : i32
    %c0_i32_1 = arith.constant 0 : i32
    %c0_i32_2 = arith.constant 0 : i32
    return %arg0, %c0_i32, %c0_i32_0, %c0_i32_1 : i32, i32, i32, i32
  }
  func.func @transform_1(%arg0: i32, %arg1: i32) -> (i32, i32) {
    %c0_i32 = arith.constant 0 : i32
    %c0_i32_0 = arith.constant 0 : i32
    %c0_i32_1 = arith.constant 0 : i32
    return %c0_i32, %c0_i32_0 : i32, i32
  }
  func.func @transform_2(%arg0: i32, %arg1: i32) -> (i32, i32) {
    %c0_i32 = arith.constant 0 : i32
    %c0_i32_0 = arith.constant 0 : i32
    %c0_i32_1 = arith.constant 0 : i32
    return %c0_i32, %c0_i32_0 : i32, i32
  }
  func.func @transform_3(%arg0: i32, %arg1: i32) -> (i32, i32) {
    %c0_i32 = arith.constant 0 : i32
    %c0_i32_0 = arith.constant 0 : i32
    %c0_i32_1 = arith.constant 0 : i32
    return %c0_i32, %c0_i32_0 : i32, i32
  }
  func.func @transform_4(%arg0: i32, %arg1: i32) -> (i32, i32) {
    %c0_i32 = arith.constant 0 : i32
    %c0_i32_0 = arith.constant 0 : i32
    %c0_i32_1 = arith.constant 0 : i32
    return %c0_i32, %c0_i32_0 : i32, i32
  }
  func.func @transform_5(%arg0: i32, %arg1: i32) -> (i32, i32) {
    %c0_i32 = arith.constant 0 : i32
    %c0_i32_0 = arith.constant 0 : i32
    %c0_i32_1 = arith.constant 0 : i32
    return %c0_i32, %c0_i32_0 : i32, i32
  }
  func.func @transform_6(%arg0: i32, %arg1: i32) -> (i32, i32, i32, i32) {
    %c0_i32 = arith.constant 0 : i32
    %c0_i32_0 = arith.constant 0 : i32
    %c0_i32_1 = arith.constant 0 : i32
    return %arg0, %arg1, %c0_i32, %c0_i32_0 : i32, i32, i32, i32
  }
}

</mosaic_0001>

<llo_original>
// kernel: tpu_custom_call.1
$region0: #{tpu_custom_call.1}
  #allocation0 [shape = 'u32[]', space=smem, size = 0x4, offset = 0x4, fixed_abs, tag = 'smem constant byte address 0x4 - core index']
  #allocation1 [shape = 'u32[144,128]{1,0:T(1,128)}', space=vmem, size = 0x12000, scoped, tag = 'internal scratch']
  %s0 = inlined_call_operand.vmem [shape: bf16[2,18,18,4], index: 0, kind: input, shape index: {}]
  %s1 = inlined_call_operand.vmem [shape: bf16[36,256], index: 1, kind: input, shape index: {}]
  %s2 = inlined_call_operand.vmem [shape: f32[1,256], index: 2, kind: input, shape index: {}]
  %s3 = inlined_call_operand.vmem [shape: f32[1,256], index: 3, kind: input, shape index: {}]
  %s4 = inlined_call_operand.vmem [shape: bf16[256,128], index: 4, kind: input, shape index: {}]
  %s5 = inlined_call_operand.vmem [shape: f32[1,128], index: 5, kind: input, shape index: {}]
  %s6 = inlined_call_operand.hbm [shape: f32[2,16,16,128], index: 6, kind: output, shape index: {}]
  %s7 = sld [smem:[#allocation0]]
  $region57: #{tpu_custom_call.1} parent=0
    _
  %s9 = ssub.s32 1, %s7
  %s10 = scalar_select 0, %s9, %s7
  $region1: #{tpu_custom_call.1} parent=0
    #allocation2 [shape = 'u8[262144]{0}', space=vmem, size = 0x40000, scoped, tag = 'output window, operand 0']
    #allocation3 [shape = 's32[2]{0}', space=sflag, size = 0x8, scoped, tag = 'scoped memory for tpu_custom_call.1']
    %11 = vsyncpa [#allocation3], 0
    %s12 = scalar_lea.sflag [#allocation3], 1
    %13 = vsyncpa %s12, 0
    loop: start=0, step=1, limit=4
    $region2: #{tpu_custom_call.1} parent=1 // loop_pre_header
      _
    $region3: #{tpu_custom_call.1} parent=1 // loop_header
      %s15 = sphi 0, %s19
      %p16 = scmp.ge.s32.totalorder %s15, 4
      %s22 = sphi 0, %s34
      %s23 = sphi 0, %s30
      %s24 = sphi 0, %s22
      %s25 = sphi 0, %s23
      %s26 = sphi 0, %s24
      %s27 = sphi 0, %s25
      %s37 = sphi 0, %s39
      %s40 = sphi 0, %s37
      %s41 = sphi 0, %s40
      %s57 = sphi 0, %s41
      %s61 = sphi 0, %s61
      %s63 = sphi 0, %s61
      %s64 = sphi 0, %s63
      %s78 = sphi 0, %s64
      %s82 = sphi 0, %s82
      %s84 = sphi 0, %s82
      %s85 = sphi 0, %s84
      %s99 = sphi 0, %s85
      %s103 = sphi 0, %s103
      %s105 = sphi 0, %s103
      %s106 = sphi 0, %s105
      %s120 = sphi 0, %s106
      %s124 = sphi 0, %s124
      %s126 = sphi 0, %s124
      %s127 = sphi 0, %s126
      %s141 = sphi 0, %s127
      %s145 = sphi 0, %s145
      %s147 = sphi 0, %s145
      %s148 = sphi 0, %s147
      %s162 = sphi 0, %s148
      %s170 = sphi 0, %s172
      %s173 = sphi 0, %s170
      %s174 = sphi 0, %s173
      %s190 = sphi 0, %s174
    $region4: #{tpu_custom_call.1} parent=1 // loop_header_branch
      %18 = sbr.rel (%p16) target = $region8
    $region5: #{tpu_custom_call.1} parent=1 // loop_body
      %s20 = ssub.s32 %s15, 1
      %s21 = ssub.s32 %s15, 2
      %s28 = sadd.s32 1, %s23
      %p29 = scmp.ge.s32.totalorder %s28, 1
      %s30 = scalar_select %p29, 0, %s28
      %s31 = sadd.s32 1, %s22
      %s32 = scalar_select %p29, %s31, %s22
      %p33 = scmp.ge.s32.totalorder %s32, 2
      %s34 = scalar_select %p33, 0, %s32
      %s35 = ssub.s32 %s22, %s34
      %p36 = scmp.eq.s32.totalorder %s35, 0
      %s38 = sadd.s32 %s37, 1
      %s39 = scalar_select %p36, %s37, %s38
      %p42 = pneg %p36
      %p43 = scmp.eq.s32.totalorder %s15, 1
      %p44 = por %p42, %p43
      %p45 = scmp.ne.s32.totalorder %s37, %s40
      %p46 = scmp.eq.s32.totalorder %s15, 0
      %p47 = por %p45, %p46
      %p48 = scmp.ne.s32.totalorder %s37, %s40
      %p49 = scmp.eq.s32.totalorder %s20, 1
      %p50 = por %p48, %p49
      %p51 = scmp.ne.s32.totalorder %s40, %s41
      %p52 = scmp.eq.s32.totalorder %s20, 0
      %p53 = por %p51, %p52
      %p54 = scmp.ne.s32.totalorder %s40, %s41
      %p55 = scmp.eq.s32.totalorder %s21, 1
      %p56 = por %p54, %p55
      %p58 = scmp.ne.s32.totalorder %s41, %s57
      %p59 = scmp.eq.s32.totalorder %s21, 0
      %p60 = por %p58, %p59
      %s62 = sadd.s32 %s61, 1
      %p65 = scmp.eq.s32.totalorder %s15, 1
      %p66 = scmp.ne.s32.totalorder %s61, %s63
      %p67 = scmp.eq.s32.totalorder %s15, 0
      %p68 = por %p66, %p67
      %p69 = scmp.ne.s32.totalorder %s61, %s63
      %p70 = scmp.eq.s32.totalorder %s20, 1
      %p71 = por %p69, %p70
      %p72 = scmp.ne.s32.totalorder %s63, %s64
      %p73 = scmp.eq.s32.totalorder %s20, 0
      %p74 = por %p72, %p73
      %p75 = scmp.ne.s32.totalorder %s63, %s64
      %p76 = scmp.eq.s32.totalorder %s21, 1
      %p77 = por %p75, %p76
      %p79 = scmp.ne.s32.totalorder %s64, %s78
      %p80 = scmp.eq.s32.totalorder %s21, 0
      %p81 = por %p79, %p80
      %s83 = sadd.s32 %s82, 1
      %p86 = scmp.eq.s32.totalorder %s15, 1
      %p87 = scmp.ne.s32.totalorder %s82, %s84
      %p88 = scmp.eq.s32.totalorder %s15, 0
      %p89 = por %p87, %p88
      %p90 = scmp.ne.s32.totalorder %s82, %s84
      %p91 = scmp.eq.s32.totalorder %s20, 1
      %p92 = por %p90, %p91
      %p93 = scmp.ne.s32.totalorder %s84, %s85
      %p94 = scmp.eq.s32.totalorder %s20, 0
      %p95 = por %p93, %p94
      %p96 = scmp.ne.s32.totalorder %s84, %s85
      %p97 = scmp.eq.s32.totalorder %s21, 1
      %p98 = por %p96, %p97
      %p100 = scmp.ne.s32.totalorder %s85, %s99
      %p101 = scmp.eq.s32.totalorder %s21, 0
      %p102 = por %p100, %p101
      %s104 = sadd.s32 %s103, 1
      %p107 = scmp.eq.s32.totalorder %s15, 1
      %p108 = scmp.ne.s32.totalorder %s103, %s105
      %p109 = scmp.eq.s32.totalorder %s15, 0
      %p110 = por %p108, %p109
      %p111 = scmp.ne.s32.totalorder %s103, %s105
      %p112 = scmp.eq.s32.totalorder %s20, 1
      %p113 = por %p111, %p112
      %p114 = scmp.ne.s32.totalorder %s105, %s106
      %p115 = scmp.eq.s32.totalorder %s20, 0
      %p116 = por %p114, %p115
      %p117 = scmp.ne.s32.totalorder %s105, %s106
      %p118 = scmp.eq.s32.totalorder %s21, 1
      %p119 = por %p117, %p118
      %p121 = scmp.ne.s32.totalorder %s106, %s120
      %p122 = scmp.eq.s32.totalorder %s21, 0
      %p123 = por %p121, %p122
      %s125 = sadd.s32 %s124, 1
      %p128 = scmp.eq.s32.totalorder %s15, 1
      %p129 = scmp.ne.s32.totalorder %s124, %s126
      %p130 = scmp.eq.s32.totalorder %s15, 0
      %p131 = por %p129, %p130
      %p132 = scmp.ne.s32.totalorder %s124, %s126
      %p133 = scmp.eq.s32.totalorder %s20, 1
      %p134 = por %p132, %p133
      %p135 = scmp.ne.s32.totalorder %s126, %s127
      %p136 = scmp.eq.s32.totalorder %s20, 0
      %p137 = por %p135, %p136
      %p138 = scmp.ne.s32.totalorder %s126, %s127
      %p139 = scmp.eq.s32.totalorder %s21, 1
      %p140 = por %p138, %p139
      %p142 = scmp.ne.s32.totalorder %s127, %s141
      %p143 = scmp.eq.s32.totalorder %s21, 0
      %p144 = por %p142, %p143
      %s146 = sadd.s32 %s145, 1
      %p149 = scmp.eq.s32.totalorder %s15, 1
      %p150 = scmp.ne.s32.totalorder %s145, %s147
      %p151 = scmp.eq.s32.totalorder %s15, 0
      %p152 = por %p150, %p151
      %p153 = scmp.ne.s32.totalorder %s145, %s147
      %p154 = scmp.eq.s32.totalorder %s20, 1
      %p155 = por %p153, %p154
      %p156 = scmp.ne.s32.totalorder %s147, %s148
      %p157 = scmp.eq.s32.totalorder %s20, 0
      %p158 = por %p156, %p157
      %p159 = scmp.ne.s32.totalorder %s147, %s148
      %p160 = scmp.eq.s32.totalorder %s21, 1
      %p161 = por %p159, %p160
      %p163 = scmp.ne.s32.totalorder %s148, %s162
      %p164 = scmp.eq.s32.totalorder %s21, 0
      %p165 = por %p163, %p164
      %s166 = ssub.s32 %s22, %s34
      %s167 = ssub.s32 %s23, %s30
      %s168 = sor.u32 %s166, %s167
      %p169 = scmp.eq.s32.totalorder %s168, 0
      %s171 = sadd.s32 %s170, 1
      %s172 = scalar_select %p169, %s170, %s171
      %p175 = pneg %p169
      %p176 = scmp.eq.s32.totalorder %s15, 1
      %p177 = por %p175, %p176
      %p178 = scmp.ne.s32.totalorder %s170, %s173
      %p179 = scmp.eq.s32.totalorder %s15, 0
      %p180 = por %p178, %p179
      %p181 = scmp.ne.s32.totalorder %s170, %s173
      %p182 = scmp.eq.s32.totalorder %s20, 1
      %p183 = por %p181, %p182
      %p184 = scmp.ne.s32.totalorder %s173, %s174
      %p185 = scmp.eq.s32.totalorder %s20, 0
      %p186 = por %p184, %p185
      %p187 = scmp.ne.s32.totalorder %s173, %s174
      %p188 = scmp.eq.s32.totalorder %s21, 1
      %p189 = por %p187, %p188
      %p191 = scmp.ne.s32.totalorder %s174, %s190
      %p192 = scmp.eq.s32.totalorder %s21, 0
      %p193 = por %p191, %p192
      %p194 = scmp.le.s32.totalorder 1, %s15
      %p195 = scmp.lt.s32.totalorder %s15, 3
      %p196 = pnand %p194, %p195
      %p197 = pneg %p196
      // Predicated region
      $region9: #{tpu_custom_call.1} parent=5 // pred_check
        _
      $region10: #{tpu_custom_call.1} parent=5 // pred_check_branch
        %199 = sbr.rel (%p196) target = $region12
      $region11: #{tpu_custom_call.1} parent=5 // pred_region
        %s200 = ssub.s32 %s15, 1
        // Predicated region
        $region13: #{tpu_custom_call.1} parent=11 // pred_check
          %p201 = pneg %p74
        $region14: #{tpu_custom_call.1} parent=11 // pred_check_branch
          %203 = sbr.rel (%p201) target = $region16
        $region15: #{tpu_custom_call.1} parent=11 // pred_region
          _
        $region16: #{tpu_custom_call.1} parent=11 // pred_fallthru
          _
        // Predicated region
        $region17: #{tpu_custom_call.1} parent=11 // pred_check
          %p204 = pneg %p95
        $region18: #{tpu_custom_call.1} parent=11 // pred_check_branch
          %206 = sbr.rel (%p204) target = $region20
        $region19: #{tpu_custom_call.1} parent=11 // pred_region
          _
        $region20: #{tpu_custom_call.1} parent=11 // pred_fallthru
          _
        // Predicated region
        $region21: #{tpu_custom_call.1} parent=11 // pred_check
          %p207 = pneg %p116
        $region22: #{tpu_custom_call.1} parent=11 // pred_check_branch
          %209 = sbr.rel (%p207) target = $region24
        $region23: #{tpu_custom_call.1} parent=11 // pred_region
          _
        $region24: #{tpu_custom_call.1} parent=11 // pred_fallthru
          _
        // Predicated region
        $region25: #{tpu_custom_call.1} parent=11 // pred_check
          %p210 = pneg %p137
        $region26: #{tpu_custom_call.1} parent=11 // pred_check_branch
          %212 = sbr.rel (%p210) target = $region28
        $region27: #{tpu_custom_call.1} parent=11 // pred_region
          _
        $region28: #{tpu_custom_call.1} parent=11 // pred_fallthru
          _
        // Predicated region
        $region29: #{tpu_custom_call.1} parent=11 // pred_check
          %p213 = pneg %p158
        $region30: #{tpu_custom_call.1} parent=11 // pred_check_branch
          %215 = sbr.rel (%p213) target = $region32
        $region31: #{tpu_custom_call.1} parent=11 // pred_region
          _
        $region32: #{tpu_custom_call.1} parent=11 // pred_fallthru
          _
      $region12: #{tpu_custom_call.1} parent=5 // pred_fallthru
        _
      %p216 = scmp.lt.s32.totalorder %s15, 2
      // Predicated region
      $region33: #{tpu_custom_call.1} parent=5 // pred_check
        %p217 = pneg %p216
      $region34: #{tpu_custom_call.1} parent=5 // pred_check_branch
        %219 = sbr.rel (%p217) target = $region36
      $region35: #{tpu_custom_call.1} parent=5 // pred_region
        // Predicated region
        $region37: #{tpu_custom_call.1} parent=35 // pred_check
          %p220 = pneg %p47
        $region38: #{tpu_custom_call.1} parent=35 // pred_check_branch
          %222 = sbr.rel (%p220) target = $region40
        $region39: #{tpu_custom_call.1} parent=35 // pred_region
          %p223 = scmp.lt.s32.totalorder %s22, 1
          %s224 = scalar_select %p223, %s22, 1
          %s225 = smul.addr %s224, 54
          %s226 = smul.addr %s225, 4
          %s227 = scalar_lea.vmem %s0, %s226
        $region40: #{tpu_custom_call.1} parent=35 // pred_fallthru
          _
      $region36: #{tpu_custom_call.1} parent=5 // pred_fallthru
        _
      %p228 = scmp.le.s32.totalorder 1, %s15
      %p229 = scmp.lt.s32.totalorder %s15, 3
      %p230 = pnand %p228, %p229
      %p231 = pneg %p230
      // Predicated region
      $region41: #{tpu_custom_call.1} parent=5 // pred_check
        _
      $region42: #{tpu_custom_call.1} parent=5 // pred_check_branch
        %233 = sbr.rel (%p230) target = $region44
      $region43: #{tpu_custom_call.1} parent=5 // pred_region
        %s234 = ssub.s32 %s15, 1
        %p235 = scmp.lt.s32.totalorder %s24, 1
        %s236 = scalar_select %p235, %s24, 1
        %s237 = smul.addr %s236, 54
        %s238 = smul.addr %s237, 4
        %s239 = scalar_lea.vmem %s0, %s238
        %p240 = pneg %p53
        %p241 = pneg %p50
        %p242 = pneg %p74
        %p243 = pneg %p71
        %p244 = pneg %p95
        %p245 = pneg %p92
        %p246 = pneg %p116
        %p247 = pneg %p113
        %p248 = pneg %p137
        %p249 = pneg %p134
        %p250 = pneg %p158
        %p251 = pneg %p155
        %p252 = pneg %p186
        %p253 = pneg %p183
        %s254 = sand.u32 %s173, 1
        %s255 = scalar_lea.sflag [#allocation3], %s254
        %s256 = sand.u32 %s173, 1
        %s257 = smul.addr %s256, 256
        %s258 = scalar_lea.vmem [#allocation2], %s257
        %p259 = scmp.lt.s32.totalorder %s24, 1
        %s260 = scalar_select %p259, %s24, 1
        %s261 = smul.addr %s260, 54
        %s262 = smul.addr %s261, 4
        %s263 = scalar_lea.vmem %s0, %s262
        %s264 = smul.u32 16, %s25
        %s266 = smul.u32 %s25, 16
        %s267 = smul.u32 %s266, 3
        %s268 = smul.addr %s267, 4
        %s269 = scalar_lea.vmem %s263, %s268
        %v270 = vld [vmem:[%s269] sm:$0xf]
        %v271 = vld [vmem:[%s269 + $0x4] sm:$0xf]
        %v272 = vld [vmem:[%s269 + $0x8] sm:$0x1]
        %v273 = vld [vmem:[%s269 + $0xc] sm:$0xf]
        %v274 = vld [vmem:[%s269 + $0x10] sm:$0xf]
        %v275 = vld [vmem:[%s269 + $0x14] sm:$0x1]
        %v276 = vld [vmem:[%s269 + $0x18] sm:$0xf]
        %v277 = vld [vmem:[%s269 + $0x1c] sm:$0xf]
        %v278 = vld [vmem:[%s269 + $0x20] sm:$0x1]
        %v279 = vld [vmem:[%s269 + $0x24] sm:$0xf]
        %v280 = vld [vmem:[%s269 + $0x28] sm:$0xf]
        %v281 = vld [vmem:[%s269 + $0x2c] sm:$0x1]
        %v282 = vld [vmem:[%s269 + $0x30] sm:$0xf]
        %v283 = vld [vmem:[%s269 + $0x34] sm:$0xf]
        %v284 = vld [vmem:[%s269 + $0x38] sm:$0x1]
        %v285 = vld [vmem:[%s269 + $0x3c] sm:$0xf]
        %v286 = vld [vmem:[%s269 + $0x40] sm:$0xf]
        %v287 = vld [vmem:[%s269 + $0x44] sm:$0x1]
        %v288 = vld [vmem:[%s269 + $0x48] sm:$0xf]
        %v289 = vld [vmem:[%s269 + $0x4c] sm:$0xf]
        %v290 = vld [vmem:[%s269 + $0x50] sm:$0x1]
        %v291 = vld [vmem:[%s269 + $0x54] sm:$0xf]
        %v292 = vld [vmem:[%s269 + $0x58] sm:$0xf]
        %v293 = vld [vmem:[%s269 + $0x5c] sm:$0x1]
        %v294 = vld [vmem:[%s269 + $0x60] sm:$0xf]
        %v295 = vld [vmem:[%s269 + $0x64] sm:$0xf]
        %v296 = vld [vmem:[%s269 + $0x68] sm:$0x1]
        %v297 = vld [vmem:[%s269 + $0x6c] sm:$0xf]
        %v298 = vld [vmem:[%s269 + $0x70] sm:$0xf]
        %v299 = vld [vmem:[%s269 + $0x74] sm:$0x1]
        %v300 = vld [vmem:[%s269 + $0x78] sm:$0xf]
        %v301 = vld [vmem:[%s269 + $0x7c] sm:$0xf]
        %v302 = vld [vmem:[%s269 + $0x80] sm:$0x1]
        %v303 = vld [vmem:[%s269 + $0x84] sm:$0xf]
        %v304 = vld [vmem:[%s269 + $0x88] sm:$0xf]
        %v305 = vld [vmem:[%s269 + $0x8c] sm:$0x1]
        %v306 = vld [vmem:[%s269 + $0x90] sm:$0xf]
        %v307 = vld [vmem:[%s269 + $0x94] sm:$0xf]
        %v308 = vld [vmem:[%s269 + $0x98] sm:$0x1]
        %v309 = vld [vmem:[%s269 + $0x9c] sm:$0xf]
        %v310 = vld [vmem:[%s269 + $0xa0] sm:$0xf]
        %v311 = vld [vmem:[%s269 + $0xa4] sm:$0x1]
        %v312 = vld [vmem:[%s269 + $0xa8] sm:$0xf]
        %v313 = vld [vmem:[%s269 + $0xac] sm:$0xf]
        %v314 = vld [vmem:[%s269 + $0xb0] sm:$0x1]
        %v315 = vld [vmem:[%s269 + $0xb4] sm:$0xf]
        %v316 = vld [vmem:[%s269 + $0xb8] sm:$0xf]
        %v317 = vld [vmem:[%s269 + $0xbc] sm:$0x1]
        %v318 = vld [vmem:[%s269 + $0xc0] sm:$0xf]
        %v319 = vld [vmem:[%s269 + $0xc4] sm:$0xf]
        %v320 = vld [vmem:[%s269 + $0xc8] sm:$0x1]
        %v321 = vld [vmem:[%s269 + $0xcc] sm:$0xf]
        %v322 = vld [vmem:[%s269 + $0xd0] sm:$0xf]
        %v323 = vld [vmem:[%s269 + $0xd4] sm:$0x1]
        %vm324 = vsmask.f32 3328
        %vm325 = vsmask.f32 7440
        %vm326 = vmor %vm324, %vm325
        %v328 = vshrl.u32 %v270, 16
        %v330 = vrot.slane %v328, 4
        %v331 = vshll.u32 %v270, 16
        %v333 = vrot.slane %v331, 5
        %v334 = vor.u32 %v330, %v333
        %v335 = vrot.slane %v334, 4
        %v337 = vshll.u32 %v271, 16
        %v339 = vrot.slane %v337, 5
        %v340 = vsel %vm326, %v335, %v339
        %v341 = vshrl.u32 %v271, 16
        %v343 = vrot.slane %v341, 4
        %v344 = vor.u32 %v343, %v339
        %v345 = vrot.slane %v344, 4
        %v347 = vshll.u32 %v272, 16
        %v349 = vrot.slane %v347, 5
        %v350 = vsel %vm326, %v345, %v349
        %v352 = vshrl.u32 %v273, 16
        %v354 = vrot.slane %v352, 4
        %v355 = vshll.u32 %v273, 16
        %v357 = vrot.slane %v355, 5
        %v358 = vor.u32 %v354, %v357
        %v359 = vrot.slane %v358, 4
        %v361 = vshll.u32 %v274, 16
        %v363 = vrot.slane %v361, 5
        %v364 = vsel %vm326, %v359, %v363
        %v365 = vshrl.u32 %v274, 16
        %v367 = vrot.slane %v365, 4
        %v368 = vor.u32 %v367, %v363
        %v369 = vrot.slane %v368, 4
        %v371 = vshll.u32 %v275, 16
        %v373 = vrot.slane %v371, 5
        %v374 = vsel %vm326, %v369, %v373
        %v376 = vshrl.u32 %v276, 16
        %v378 = vrot.slane %v376, 4
        %v379 = vshll.u32 %v276, 16
        %v381 = vrot.slane %v379, 5
        %v382 = vor.u32 %v378, %v381
        %v383 = vrot.slane %v382, 4
        %v385 = vshll.u32 %v277, 16
        %v387 = vrot.slane %v385, 5
        %v388 = vsel %vm326, %v383, %v387
        %v389 = vshrl.u32 %v277, 16
        %v391 = vrot.slane %v389, 4
        %v392 = vor.u32 %v391, %v387
        %v393 = vrot.slane %v392, 4
        %v395 = vshll.u32 %v278, 16
        %v397 = vrot.slane %v395, 5
        %v398 = vsel %vm326, %v393, %v397
        %v400 = vshrl.u32 %v279, 16
        %v402 = vrot.slane %v400, 4
        %v403 = vshll.u32 %v279, 16
        %v405 = vrot.slane %v403, 5
        %v406 = vor.u32 %v402, %v405
        %v407 = vrot.slane %v406, 4
        %v409 = vshll.u32 %v280, 16
        %v411 = vrot.slane %v409, 5
        %v412 = vsel %vm326, %v407, %v411
        %v413 = vshrl.u32 %v280, 16
        %v415 = vrot.slane %v413, 4
        %v416 = vor.u32 %v415, %v411
        %v417 = vrot.slane %v416, 4
        %v419 = vshll.u32 %v281, 16
        %v421 = vrot.slane %v419, 5
        %v422 = vsel %vm326, %v417, %v421
        %v424 = vshrl.u32 %v282, 16
        %v426 = vrot.slane %v424, 4
        %v427 = vshll.u32 %v282, 16
        %v429 = vrot.slane %v427, 5
        %v430 = vor.u32 %v426, %v429
        %v431 = vrot.slane %v430, 4
        %v433 = vshll.u32 %v283, 16
        %v435 = vrot.slane %v433, 5
        %v436 = vsel %vm326, %v431, %v435
        %v437 = vshrl.u32 %v283, 16
        %v439 = vrot.slane %v437, 4
        %v440 = vor.u32 %v439, %v435
        %v441 = vrot.slane %v440, 4
        %v443 = vshll.u32 %v284, 16
        %v445 = vrot.slane %v443, 5
        %v446 = vsel %vm326, %v441, %v445
        %v448 = vshrl.u32 %v285, 16
        %v450 = vrot.slane %v448, 4
        %v451 = vshll.u32 %v285, 16
        %v453 = vrot.slane %v451, 5
        %v454 = vor.u32 %v450, %v453
        %v455 = vrot.slane %v454, 4
        %v457 = vshll.u32 %v286, 16
        %v459 = vrot.slane %v457, 5
        %v460 = vsel %vm326, %v455, %v459
        %v461 = vshrl.u32 %v286, 16
        %v463 = vrot.slane %v461, 4
        %v464 = vor.u32 %v463, %v459
        %v465 = vrot.slane %v464, 4
        %v467 = vshll.u32 %v287, 16
        %v469 = vrot.slane %v467, 5
        %v470 = vsel %vm326, %v465, %v469
        %v472 = vshrl.u32 %v288, 16
        %v474 = vrot.slane %v472, 4
        %v475 = vshll.u32 %v288, 16
        %v477 = vrot.slane %v475, 5
        %v478 = vor.u32 %v474, %v477
        %v479 = vrot.slane %v478, 4
        %v481 = vshll.u32 %v289, 16
        %v483 = vrot.slane %v481, 5
        %v484 = vsel %vm326, %v479, %v483
        %v485 = vshrl.u32 %v289, 16
        %v487 = vrot.slane %v485, 4
        %v488 = vor.u32 %v487, %v483
        %v489 = vrot.slane %v488, 4
        %v491 = vshll.u32 %v290, 16
        %v493 = vrot.slane %v491, 5
        %v494 = vsel %vm326, %v489, %v493
        %v496 = vshrl.u32 %v291, 16
        %v498 = vrot.slane %v496, 4
        %v499 = vshll.u32 %v291, 16
        %v501 = vrot.slane %v499, 5
        %v502 = vor.u32 %v498, %v501
        %v503 = vrot.slane %v502, 4
        %v505 = vshll.u32 %v292, 16
        %v507 = vrot.slane %v505, 5
        %v508 = vsel %vm326, %v503, %v507
        %v509 = vshrl.u32 %v292, 16
        %v511 = vrot.slane %v509, 4
        %v512 = vor.u32 %v511, %v507
        %v513 = vrot.slane %v512, 4
        %v515 = vshll.u32 %v293, 16
        %v517 = vrot.slane %v515, 5
        %v518 = vsel %vm326, %v513, %v517
        %v520 = vshrl.u32 %v294, 16
        %v522 = vrot.slane %v520, 4
        %v523 = vshll.u32 %v294, 16
        %v525 = vrot.slane %v523, 5
        %v526 = vor.u32 %v522, %v525
        %v527 = vrot.slane %v526, 4
        %v529 = vshll.u32 %v295, 16
        %v531 = vrot.slane %v529, 5
        %v532 = vsel %vm326, %v527, %v531
        %v533 = vshrl.u32 %v295, 16
        %v535 = vrot.slane %v533, 4
        %v536 = vor.u32 %v535, %v531
        %v537 = vrot.slane %v536, 4
        %v539 = vshll.u32 %v296, 16
        %v541 = vrot.slane %v539, 5
        %v542 = vsel %vm326, %v537, %v541
        %v544 = vshrl.u32 %v297, 16
        %v546 = vrot.slane %v544, 4
        %v547 = vshll.u32 %v297, 16
        %v549 = vrot.slane %v547, 5
        %v550 = vor.u32 %v546, %v549
        %v551 = vrot.slane %v550, 4
        %v553 = vshll.u32 %v298, 16
        %v555 = vrot.slane %v553, 5
        %v556 = vsel %vm326, %v551, %v555
        %v557 = vshrl.u32 %v298, 16
        %v559 = vrot.slane %v557, 4
        %v560 = vor.u32 %v559, %v555
        %v561 = vrot.slane %v560, 4
        %v563 = vshll.u32 %v299, 16
        %v565 = vrot.slane %v563, 5
        %v566 = vsel %vm326, %v561, %v565
        %v568 = vshrl.u32 %v300, 16
        %v570 = vrot.slane %v568, 4
        %v571 = vshll.u32 %v300, 16
        %v573 = vrot.slane %v571, 5
        %v574 = vor.u32 %v570, %v573
        %v575 = vrot.slane %v574, 4
        %v577 = vshll.u32 %v301, 16
        %v579 = vrot.slane %v577, 5
        %v580 = vsel %vm326, %v575, %v579
        %v581 = vshrl.u32 %v301, 16
        %v583 = vrot.slane %v581, 4
        %v584 = vor.u32 %v583, %v579
        %v585 = vrot.slane %v584, 4
        %v587 = vshll.u32 %v302, 16
        %v589 = vrot.slane %v587, 5
        %v590 = vsel %vm326, %v585, %v589
        %v592 = vshrl.u32 %v303, 16
        %v594 = vrot.slane %v592, 4
        %v595 = vshll.u32 %v303, 16
        %v597 = vrot.slane %v595, 5
        %v598 = vor.u32 %v594, %v597
        %v599 = vrot.slane %v598, 4
        %v601 = vshll.u32 %v304, 16
        %v603 = vrot.slane %v601, 5
        %v604 = vsel %vm326, %v599, %v603
        %v605 = vshrl.u32 %v304, 16
        %v607 = vrot.slane %v605, 4
        %v608 = vor.u32 %v607, %v603
        %v609 = vrot.slane %v608, 4
        %v611 = vshll.u32 %v305, 16
        %v613 = vrot.slane %v611, 5
        %v614 = vsel %vm326, %v609, %v613
        %v616 = vshrl.u32 %v306, 16
        %v618 = vrot.slane %v616, 4
        %v619 = vshll.u32 %v306, 16
        %v621 = vrot.slane %v619, 5
        %v622 = vor.u32 %v618, %v621
        %v623 = vrot.slane %v622, 4
        %v625 = vshll.u32 %v307, 16
        %v627 = vrot.slane %v625, 5
        %v628 = vsel %vm326, %v623, %v627
        %v629 = vshrl.u32 %v307, 16
        %v631 = vrot.slane %v629, 4
        %v632 = vor.u32 %v631, %v627
        %v633 = vrot.slane %v632, 4
        %v635 = vshll.u32 %v308, 16
        %v637 = vrot.slane %v635, 5
        %v638 = vsel %vm326, %v633, %v637
        %v640 = vshrl.u32 %v309, 16
        %v642 = vrot.slane %v640, 4
        %v643 = vshll.u32 %v309, 16
        %v645 = vrot.slane %v643, 5
        %v646 = vor.u32 %v642, %v645
        %v647 = vrot.slane %v646, 4
        %v649 = vshll.u32 %v310, 16
        %v651 = vrot.slane %v649, 5
        %v652 = vsel %vm326, %v647, %v651
        %v653 = vshrl.u32 %v310, 16
        %v655 = vrot.slane %v653, 4
        %v656 = vor.u32 %v655, %v651
        %v657 = vrot.slane %v656, 4
        %v659 = vshll.u32 %v311, 16
        %v661 = vrot.slane %v659, 5
        %v662 = vsel %vm326, %v657, %v661
        %v664 = vshrl.u32 %v312, 16
        %v666 = vrot.slane %v664, 4
        %v667 = vshll.u32 %v312, 16
        %v669 = vrot.slane %v667, 5
        %v670 = vor.u32 %v666, %v669
        %v671 = vrot.slane %v670, 4
        %v673 = vshll.u32 %v313, 16
        %v675 = vrot.slane %v673, 5
        %v676 = vsel %vm326, %v671, %v675
        %v677 = vshrl.u32 %v313, 16
        %v679 = vrot.slane %v677, 4
        %v680 = vor.u32 %v679, %v675
        %v681 = vrot.slane %v680, 4
        %v683 = vshll.u32 %v314, 16
        %v685 = vrot.slane %v683, 5
        %v686 = vsel %vm326, %v681, %v685
        %v688 = vshrl.u32 %v315, 16
        %v690 = vrot.slane %v688, 4
        %v691 = vshll.u32 %v315, 16
        %v693 = vrot.slane %v691, 5
        %v694 = vor.u32 %v690, %v693
        %v695 = vrot.slane %v694, 4
        %v697 = vshll.u32 %v316, 16
        %v699 = vrot.slane %v697, 5
        %v700 = vsel %vm326, %v695, %v699
        %v701 = vshrl.u32 %v316, 16
        %v703 = vrot.slane %v701, 4
        %v704 = vor.u32 %v703, %v699
        %v705 = vrot.slane %v704, 4
        %v707 = vshll.u32 %v317, 16
        %v709 = vrot.slane %v707, 5
        %v710 = vsel %vm326, %v705, %v709
        %vm759 = vcmask 1042432
        %vm760 = vcmask 1046532
        %vm761 = vmor %vm759, %vm760
        %v762 = vrot.slane %v270, 5
        %v763 = vrot.slane %v762, 4
        %v764 = vrot.slane %v271, 5
        %v765 = vsel %vm761, %v763, %v764
        %v766 = vrot.slane %v764, 4
        %v767 = vrot.slane %v272, 5
        %v768 = vsel %vm761, %v766, %v767
        %v769 = vrot.slane %v273, 5
        %v770 = vrot.slane %v769, 4
        %v771 = vrot.slane %v274, 5
        %v772 = vsel %vm761, %v770, %v771
        %v773 = vrot.slane %v771, 4
        %v774 = vrot.slane %v275, 5
        %v775 = vsel %vm761, %v773, %v774
        %v776 = vrot.slane %v276, 5
        %v777 = vrot.slane %v776, 4
        %v778 = vrot.slane %v277, 5
        %v779 = vsel %vm761, %v777, %v778
        %v780 = vrot.slane %v778, 4
        %v781 = vrot.slane %v278, 5
        %v782 = vsel %vm761, %v780, %v781
        %v783 = vrot.slane %v279, 5
        %v784 = vrot.slane %v783, 4
        %v785 = vrot.slane %v280, 5
        %v786 = vsel %vm761, %v784, %v785
        %v787 = vrot.slane %v785, 4
        %v788 = vrot.slane %v281, 5
        %v789 = vsel %vm761, %v787, %v788
        %v790 = vrot.slane %v282, 5
        %v791 = vrot.slane %v790, 4
        %v792 = vrot.slane %v283, 5
        %v793 = vsel %vm761, %v791, %v792
        %v794 = vrot.slane %v792, 4
        %v795 = vrot.slane %v284, 5
        %v796 = vsel %vm761, %v794, %v795
        %v797 = vrot.slane %v285, 5
        %v798 = vrot.slane %v797, 4
        %v799 = vrot.slane %v286, 5
        %v800 = vsel %vm761, %v798, %v799
        %v801 = vrot.slane %v799, 4
        %v802 = vrot.slane %v287, 5
        %v803 = vsel %vm761, %v801, %v802
        %v804 = vrot.slane %v288, 5
        %v805 = vrot.slane %v804, 4
        %v806 = vrot.slane %v289, 5
        %v807 = vsel %vm761, %v805, %v806
        %v808 = vrot.slane %v806, 4
        %v809 = vrot.slane %v290, 5
        %v810 = vsel %vm761, %v808, %v809
        %v811 = vrot.slane %v291, 5
        %v812 = vrot.slane %v811, 4
        %v813 = vrot.slane %v292, 5
        %v814 = vsel %vm761, %v812, %v813
        %v815 = vrot.slane %v813, 4
        %v816 = vrot.slane %v293, 5
        %v817 = vsel %vm761, %v815, %v816
        %v818 = vrot.slane %v294, 5
        %v819 = vrot.slane %v818, 4
        %v820 = vrot.slane %v295, 5
        %v821 = vsel %vm761, %v819, %v820
        %v822 = vrot.slane %v820, 4
        %v823 = vrot.slane %v296, 5
        %v824 = vsel %vm761, %v822, %v823
        %v825 = vrot.slane %v297, 5
        %v826 = vrot.slane %v825, 4
        %v827 = vrot.slane %v298, 5
        %v828 = vsel %vm761, %v826, %v827
        %v829 = vrot.slane %v827, 4
        %v830 = vrot.slane %v299, 5
        %v831 = vsel %vm761, %v829, %v830
        %v832 = vrot.slane %v300, 5
        %v833 = vrot.slane %v832, 4
        %v834 = vrot.slane %v301, 5
        %v835 = vsel %vm761, %v833, %v834
        %v836 = vrot.slane %v834, 4
        %v837 = vrot.slane %v302, 5
        %v838 = vsel %vm761, %v836, %v837
        %v839 = vrot.slane %v303, 5
        %v840 = vrot.slane %v839, 4
        %v841 = vrot.slane %v304, 5
        %v842 = vsel %vm761, %v840, %v841
        %v843 = vrot.slane %v841, 4
        %v844 = vrot.slane %v305, 5
        %v845 = vsel %vm761, %v843, %v844
        %v846 = vrot.slane %v306, 5
        %v847 = vrot.slane %v846, 4
        %v848 = vrot.slane %v307, 5
        %v849 = vsel %vm761, %v847, %v848
        %v850 = vrot.slane %v848, 4
        %v851 = vrot.slane %v308, 5
        %v852 = vsel %vm761, %v850, %v851
        %v853 = vrot.slane %v309, 5
        %v854 = vrot.slane %v853, 4
        %v855 = vrot.slane %v310, 5
        %v856 = vsel %vm761, %v854, %v855
        %v857 = vrot.slane %v855, 4
        %v858 = vrot.slane %v311, 5
        %v859 = vsel %vm761, %v857, %v858
        %v860 = vrot.slane %v312, 5
        %v861 = vrot.slane %v860, 4
        %v862 = vrot.slane %v313, 5
        %v863 = vsel %vm761, %v861, %v862
        %v864 = vrot.slane %v862, 4
        %v865 = vrot.slane %v314, 5
        %v866 = vsel %vm761, %v864, %v865
        %v867 = vrot.slane %v315, 5
        %v868 = vrot.slane %v867, 4
        %v869 = vrot.slane %v316, 5
        %v870 = vsel %vm761, %v868, %v869
        %v871 = vrot.slane %v869, 4
        %v872 = vrot.slane %v317, 5
        %v873 = vsel %vm761, %v871, %v872
        %v875 = vshrl.u32 %v318, 16
        %v877 = vrot.slane %v875, 4
        %v878 = vshll.u32 %v318, 16
        %v880 = vrot.slane %v878, 5
        %v881 = vor.u32 %v877, %v880
        %v882 = vrot.slane %v881, 4
        %v884 = vshll.u32 %v319, 16
        %v886 = vrot.slane %v884, 5
        %v887 = vsel %vm326, %v882, %v886
        %v888 = vshrl.u32 %v319, 16
        %v890 = vrot.slane %v888, 4
        %v891 = vor.u32 %v890, %v886
        %v892 = vrot.slane %v891, 4
        %v894 = vshll.u32 %v320, 16
        %v896 = vrot.slane %v894, 5
        %v897 = vsel %vm326, %v892, %v896
        %v901 = vrot.slane %v318, 5
        %v902 = vrot.slane %v901, 4
        %v903 = vrot.slane %v319, 5
        %v904 = vsel %vm761, %v902, %v903
        %v905 = vrot.slane %v903, 4
        %v906 = vrot.slane %v320, 5
        %v907 = vsel %vm761, %v905, %v906
        %v909 = vshrl.u32 %v321, 16
        %v911 = vrot.slane %v909, 4
        %v912 = vshll.u32 %v321, 16
        %v914 = vrot.slane %v912, 5
        %v915 = vor.u32 %v911, %v914
        %v916 = vrot.slane %v915, 4
        %v918 = vshll.u32 %v322, 16
        %v920 = vrot.slane %v918, 5
        %v921 = vsel %vm326, %v916, %v920
        %v922 = vshrl.u32 %v322, 16
        %v924 = vrot.slane %v922, 4
        %v925 = vor.u32 %v924, %v920
        %v926 = vrot.slane %v925, 4
        %v928 = vshll.u32 %v323, 16
        %v930 = vrot.slane %v928, 5
        %v931 = vsel %vm326, %v926, %v930
        %v935 = vrot.slane %v321, 5
        %v936 = vrot.slane %v935, 4
        %v937 = vrot.slane %v322, 5
        %v938 = vsel %vm761, %v936, %v937
        %v939 = vrot.slane %v937, 4
        %v940 = vrot.slane %v323, 5
        %v941 = vsel %vm761, %v939, %v940
        %v942 = vunpack.c.l.b16 %v270
        %v943 = vunpack.c.l.b16 %v271
        %v944 = vunpack.c.l.b16 %v273
        %v945 = vunpack.c.l.b16 %v274
        %v946 = vunpack.c.l.b16 %v276
        %v947 = vunpack.c.l.b16 %v277
        %v948 = vunpack.c.l.b16 %v279
        %v949 = vunpack.c.l.b16 %v280
        %v950 = vunpack.c.l.b16 %v282
        %v951 = vunpack.c.l.b16 %v283
        %v952 = vunpack.c.l.b16 %v285
        %v953 = vunpack.c.l.b16 %v286
        %v954 = vunpack.c.l.b16 %v288
        %v955 = vunpack.c.l.b16 %v289
        %v956 = vunpack.c.l.b16 %v291
        %v957 = vunpack.c.l.b16 %v292
        %v958 = vunpack.c.l.b16 %v294
        %v959 = vunpack.c.l.b16 %v295
        %v960 = vunpack.c.l.b16 %v297
        %v961 = vunpack.c.l.b16 %v298
        %v962 = vunpack.c.l.b16 %v300
        %v963 = vunpack.c.l.b16 %v301
        %v964 = vunpack.c.l.b16 %v303
        %v965 = vunpack.c.l.b16 %v304
        %v966 = vunpack.c.l.b16 %v306
        %v967 = vunpack.c.l.b16 %v307
        %v968 = vunpack.c.l.b16 %v309
        %v969 = vunpack.c.l.b16 %v310
        %v970 = vunpack.c.l.b16 %v312
        %v971 = vunpack.c.l.b16 %v313
        %v972 = vunpack.c.l.b16 %v315
        %v973 = vunpack.c.l.b16 %v316
        %v974 = vpack.c.b16 %v943, %v942
        %v975 = vpack.c.b16 %v945, %v944
        %v976 = vpack.c.b16 %v947, %v946
        %v977 = vpack.c.b16 %v949, %v948
        %v978 = vpack.c.b16 %v951, %v950
        %v979 = vpack.c.b16 %v953, %v952
        %v980 = vpack.c.b16 %v955, %v954
        %v981 = vpack.c.b16 %v957, %v956
        %v982 = vpack.c.b16 %v959, %v958
        %v983 = vpack.c.b16 %v961, %v960
        %v984 = vpack.c.b16 %v963, %v962
        %v985 = vpack.c.b16 %v965, %v964
        %v986 = vpack.c.b16 %v967, %v966
        %v987 = vpack.c.b16 %v969, %v968
        %v988 = vpack.c.b16 %v971, %v970
        %v989 = vpack.c.b16 %v973, %v972
        %v990 = vunpack.c.l.b16 %v340
        %v991 = vunpack.c.l.b16 %v350
        %v992 = vunpack.c.l.b16 %v364
        %v993 = vunpack.c.l.b16 %v374
        %v994 = vunpack.c.l.b16 %v388
        %v995 = vunpack.c.l.b16 %v398
        %v996 = vunpack.c.l.b16 %v412
        %v997 = vunpack.c.l.b16 %v422
        %v998 = vunpack.c.l.b16 %v436
        %v999 = vunpack.c.l.b16 %v446
        %v1000 = vunpack.c.l.b16 %v460
        %v1001 = vunpack.c.l.b16 %v470
        %v1002 = vunpack.c.l.b16 %v484
        %v1003 = vunpack.c.l.b16 %v494
        %v1004 = vunpack.c.l.b16 %v508
        %v1005 = vunpack.c.l.b16 %v518
        %v1006 = vunpack.c.l.b16 %v532
        %v1007 = vunpack.c.l.b16 %v542
        %v1008 = vunpack.c.l.b16 %v556
        %v1009 = vunpack.c.l.b16 %v566
        %v1010 = vunpack.c.l.b16 %v580
        %v1011 = vunpack.c.l.b16 %v590
        %v1012 = vunpack.c.l.b16 %v604
        %v1013 = vunpack.c.l.b16 %v614
        %v1014 = vunpack.c.l.b16 %v628
        %v1015 = vunpack.c.l.b16 %v638
        %v1016 = vunpack.c.l.b16 %v652
        %v1017 = vunpack.c.l.b16 %v662
        %v1018 = vunpack.c.l.b16 %v676
        %v1019 = vunpack.c.l.b16 %v686
        %v1020 = vunpack.c.l.b16 %v700
        %v1021 = vunpack.c.l.b16 %v710
        %v1022 = vpack.c.b16 %v991, %v990
        %v1023 = vpack.c.b16 %v993, %v992
        %v1024 = vpack.c.b16 %v995, %v994
        %v1025 = vpack.c.b16 %v997, %v996
        %v1026 = vpack.c.b16 %v999, %v998
        %v1027 = vpack.c.b16 %v1001, %v1000
        %v1028 = vpack.c.b16 %v1003, %v1002
        %v1029 = vpack.c.b16 %v1005, %v1004
        %v1030 = vpack.c.b16 %v1007, %v1006
        %v1031 = vpack.c.b16 %v1009, %v1008
        %v1032 = vpack.c.b16 %v1011, %v1010
        %v1033 = vpack.c.b16 %v1013, %v1012
        %v1034 = vpack.c.b16 %v1015, %v1014
        %v1035 = vpack.c.b16 %v1017, %v1016
        %v1036 = vpack.c.b16 %v1019, %v1018
        %v1037 = vpack.c.b16 %v1021, %v1020
        %1038 = vrot.lane.b32.xlu0 %v1022, 4
        %v1039 = vpop.permute.xlu0 %1038
        %1040 = vrot.lane.b32.xlu0 %v1023, 4
        %v1041 = vpop.permute.xlu0 %1040
        %1042 = vrot.lane.b32.xlu0 %v1024, 4
        %v1043 = vpop.permute.xlu0 %1042
        %1044 = vrot.lane.b32.xlu0 %v1025, 4
        %v1045 = vpop.permute.xlu0 %1044
        %1046 = vrot.lane.b32.xlu0 %v1026, 4
        %v1047 = vpop.permute.xlu0 %1046
        %1048 = vrot.lane.b32.xlu0 %v1027, 4
        %v1049 = vpop.permute.xlu0 %1048
        %1050 = vrot.lane.b32.xlu0 %v1028, 4
        %v1051 = vpop.permute.xlu0 %1050
        %1052 = vrot.lane.b32.xlu0 %v1029, 4
        %v1053 = vpop.permute.xlu0 %1052
        %1054 = vrot.lane.b32.xlu0 %v1030, 4
        %v1055 = vpop.permute.xlu0 %1054
        %1056 = vrot.lane.b32.xlu0 %v1031, 4
        %v1057 = vpop.permute.xlu0 %1056
        %1058 = vrot.lane.b32.xlu0 %v1032, 4
        %v1059 = vpop.permute.xlu0 %1058
        %1060 = vrot.lane.b32.xlu0 %v1033, 4
        %v1061 = vpop.permute.xlu0 %1060
        %1062 = vrot.lane.b32.xlu0 %v1034, 4
        %v1063 = vpop.permute.xlu0 %1062
        %1064 = vrot.lane.b32.xlu0 %v1035, 4
        %v1065 = vpop.permute.xlu0 %1064
        %1066 = vrot.lane.b32.xlu0 %v1036, 4
        %v1067 = vpop.permute.xlu0 %1066
        %1068 = vrot.lane.b32.xlu0 %v1037, 4
        %v1069 = vpop.permute.xlu0 %1068
        %v1070 = vunpack.c.l.b16 %v765
        %v1071 = vunpack.c.l.b16 %v768
        %v1072 = vunpack.c.l.b16 %v772
        %v1073 = vunpack.c.l.b16 %v775
        %v1074 = vunpack.c.l.b16 %v779
        %v1075 = vunpack.c.l.b16 %v782
        %v1076 = vunpack.c.l.b16 %v786
        %v1077 = vunpack.c.l.b16 %v789
        %v1078 = vunpack.c.l.b16 %v793
        %v1079 = vunpack.c.l.b16 %v796
        %v1080 = vunpack.c.l.b16 %v800
        %v1081 = vunpack.c.l.b16 %v803
        %v1082 = vunpack.c.l.b16 %v807
        %v1083 = vunpack.c.l.b16 %v810
        %v1084 = vunpack.c.l.b16 %v814
        %v1085 = vunpack.c.l.b16 %v817
        %v1086 = vunpack.c.l.b16 %v821
        %v1087 = vunpack.c.l.b16 %v824
        %v1088 = vunpack.c.l.b16 %v828
        %v1089 = vunpack.c.l.b16 %v831
        %v1090 = vunpack.c.l.b16 %v835
        %v1091 = vunpack.c.l.b16 %v838
        %v1092 = vunpack.c.l.b16 %v842
        %v1093 = vunpack.c.l.b16 %v845
        %v1094 = vunpack.c.l.b16 %v849
        %v1095 = vunpack.c.l.b16 %v852
        %v1096 = vunpack.c.l.b16 %v856
        %v1097 = vunpack.c.l.b16 %v859
        %v1098 = vunpack.c.l.b16 %v863
        %v1099 = vunpack.c.l.b16 %v866
        %v1100 = vunpack.c.l.b16 %v870
        %v1101 = vunpack.c.l.b16 %v873
        %v1102 = vpack.c.b16 %v1071, %v1070
        %v1103 = vpack.c.b16 %v1073, %v1072
        %v1104 = vpack.c.b16 %v1075, %v1074
        %v1105 = vpack.c.b16 %v1077, %v1076
        %v1106 = vpack.c.b16 %v1079, %v1078
        %v1107 = vpack.c.b16 %v1081, %v1080
        %v1108 = vpack.c.b16 %v1083, %v1082
        %v1109 = vpack.c.b16 %v1085, %v1084
        %v1110 = vpack.c.b16 %v1087, %v1086
        %v1111 = vpack.c.b16 %v1089, %v1088
        %v1112 = vpack.c.b16 %v1091, %v1090
        %v1113 = vpack.c.b16 %v1093, %v1092
        %v1114 = vpack.c.b16 %v1095, %v1094
        %v1115 = vpack.c.b16 %v1097, %v1096
        %v1116 = vpack.c.b16 %v1099, %v1098
        %v1117 = vpack.c.b16 %v1101, %v1100
        %1118 = vrot.lane.b32.xlu0 %v1102, 8
        %v1119 = vpop.permute.xlu0 %1118
        %1120 = vrot.lane.b32.xlu0 %v1103, 8
        %v1121 = vpop.permute.xlu0 %1120
        %1122 = vrot.lane.b32.xlu0 %v1104, 8
        %v1123 = vpop.permute.xlu0 %1122
        %1124 = vrot.lane.b32.xlu0 %v1105, 8
        %v1125 = vpop.permute.xlu0 %1124
        %1126 = vrot.lane.b32.xlu0 %v1106, 8
        %v1127 = vpop.permute.xlu0 %1126
        %1128 = vrot.lane.b32.xlu0 %v1107, 8
        %v1129 = vpop.permute.xlu0 %1128
        %1130 = vrot.lane.b32.xlu0 %v1108, 8
        %v1131 = vpop.permute.xlu0 %1130
        %1132 = vrot.lane.b32.xlu0 %v1109, 8
        %v1133 = vpop.permute.xlu0 %1132
        %1134 = vrot.lane.b32.xlu0 %v1110, 8
        %v1135 = vpop.permute.xlu0 %1134
        %1136 = vrot.lane.b32.xlu0 %v1111, 8
        %v1137 = vpop.permute.xlu0 %1136
        %1138 = vrot.lane.b32.xlu0 %v1112, 8
        %v1139 = vpop.permute.xlu0 %1138
        %1140 = vrot.lane.b32.xlu0 %v1113, 8
        %v1141 = vpop.permute.xlu0 %1140
        %1142 = vrot.lane.b32.xlu0 %v1114, 8
        %v1143 = vpop.permute.xlu0 %1142
        %1144 = vrot.lane.b32.xlu0 %v1115, 8
        %v1145 = vpop.permute.xlu0 %1144
        %1146 = vrot.lane.b32.xlu0 %v1116, 8
        %v1147 = vpop.permute.xlu0 %1146
        %1148 = vrot.lane.b32.xlu0 %v1117, 8
        %v1149 = vpop.permute.xlu0 %1148
        %v1150 = vunpack.c.l.b16 %v318
        %v1151 = vunpack.c.l.b16 %v319
        %v1152 = vpack.c.b16 %v1151, %v1150
        %1153 = vrot.lane.b32.xlu0 %v975, 12
        %v1154 = vpop.permute.xlu0 %1153
        %1155 = vrot.lane.b32.xlu0 %v976, 12
        %v1156 = vpop.permute.xlu0 %1155
        %1157 = vrot.lane.b32.xlu0 %v977, 12
        %v1158 = vpop.permute.xlu0 %1157
        %1159 = vrot.lane.b32.xlu0 %v978, 12
        %v1160 = vpop.permute.xlu0 %1159
        %1161 = vrot.lane.b32.xlu0 %v979, 12
        %v1162 = vpop.permute.xlu0 %1161
        %1163 = vrot.lane.b32.xlu0 %v980, 12
        %v1164 = vpop.permute.xlu0 %1163
        %1165 = vrot.lane.b32.xlu0 %v981, 12
        %v1166 = vpop.permute.xlu0 %1165
        %1167 = vrot.lane.b32.xlu0 %v982, 12
        %v1168 = vpop.permute.xlu0 %1167
        %1169 = vrot.lane.b32.xlu0 %v983, 12
        %v1170 = vpop.permute.xlu0 %1169
        %1171 = vrot.lane.b32.xlu0 %v984, 12
        %v1172 = vpop.permute.xlu0 %1171
        %1173 = vrot.lane.b32.xlu0 %v985, 12
        %v1174 = vpop.permute.xlu0 %1173
        %1175 = vrot.lane.b32.xlu0 %v986, 12
        %v1176 = vpop.permute.xlu0 %1175
        %1177 = vrot.lane.b32.xlu0 %v987, 12
        %v1178 = vpop.permute.xlu0 %1177
        %1179 = vrot.lane.b32.xlu0 %v988, 12
        %v1180 = vpop.permute.xlu0 %1179
        %1181 = vrot.lane.b32.xlu0 %v989, 12
        %v1182 = vpop.permute.xlu0 %1181
        %1183 = vrot.lane.b32.xlu0 %v1152, 12
        %v1184 = vpop.permute.xlu0 %1183
        %v1185 = vunpack.c.l.b16 %v887
        %v1186 = vunpack.c.l.b16 %v897
        %v1187 = vpack.c.b16 %v1186, %v1185
        %1188 = vrot.lane.b32.xlu0 %v1023, 16
        %v1189 = vpop.permute.xlu0 %1188
        %1190 = vrot.lane.b32.xlu0 %v1024, 16
        %v1191 = vpop.permute.xlu0 %1190
        %1192 = vrot.lane.b32.xlu0 %v1025, 16
        %v1193 = vpop.permute.xlu0 %1192
        %1194 = vrot.lane.b32.xlu0 %v1026, 16
        %v1195 = vpop.permute.xlu0 %1194
        %1196 = vrot.lane.b32.xlu0 %v1027, 16
        %v1197 = vpop.permute.xlu0 %1196
        %1198 = vrot.lane.b32.xlu0 %v1028, 16
        %v1199 = vpop.permute.xlu0 %1198
        %1200 = vrot.lane.b32.xlu0 %v1029, 16
        %v1201 = vpop.permute.xlu0 %1200
        %1202 = vrot.lane.b32.xlu0 %v1030, 16
        %v1203 = vpop.permute.xlu0 %1202
        %1204 = vrot.lane.b32.xlu0 %v1031, 16
        %v1205 = vpop.permute.xlu0 %1204
        %1206 = vrot.lane.b32.xlu0 %v1032, 16
        %v1207 = vpop.permute.xlu0 %1206
        %1208 = vrot.lane.b32.xlu0 %v1033, 16
        %v1209 = vpop.permute.xlu0 %1208
        %1210 = vrot.lane.b32.xlu0 %v1034, 16
        %v1211 = vpop.permute.xlu0 %1210
        %1212 = vrot.lane.b32.xlu0 %v1035, 16
        %v1213 = vpop.permute.xlu0 %1212
        %1214 = vrot.lane.b32.xlu0 %v1036, 16
        %v1215 = vpop.permute.xlu0 %1214
        %1216 = vrot.lane.b32.xlu0 %v1037, 16
        %v1217 = vpop.permute.xlu0 %1216
        %1218 = vrot.lane.b32.xlu0 %v1187, 16
        %v1219 = vpop.permute.xlu0 %1218
        %v1220 = vunpack.c.l.b16 %v904
        %v1221 = vunpack.c.l.b16 %v907
        %v1222 = vpack.c.b16 %v1221, %v1220
        %1223 = vrot.lane.b32.xlu0 %v1103, 20
        %v1224 = vpop.permute.xlu0 %1223
        %1225 = vrot.lane.b32.xlu0 %v1104, 20
        %v1226 = vpop.permute.xlu0 %1225
        %1227 = vrot.lane.b32.xlu0 %v1105, 20
        %v1228 = vpop.permute.xlu0 %1227
        %1229 = vrot.lane.b32.xlu0 %v1106, 20
        %v1230 = vpop.permute.xlu0 %1229
        %1231 = vrot.lane.b32.xlu0 %v1107, 20
        %v1232 = vpop.permute.xlu0 %1231
        %1233 = vrot.lane.b32.xlu0 %v1108, 20
        %v1234 = vpop.permute.xlu0 %1233
        %1235 = vrot.lane.b32.xlu0 %v1109, 20
        %v1236 = vpop.permute.xlu0 %1235
        %1237 = vrot.lane.b32.xlu0 %v1110, 20
        %v1238 = vpop.permute.xlu0 %1237
        %1239 = vrot.lane.b32.xlu0 %v1111, 20
        %v1240 = vpop.permute.xlu0 %1239
        %1241 = vrot.lane.b32.xlu0 %v1112, 20
        %v1242 = vpop.permute.xlu0 %1241
        %1243 = vrot.lane.b32.xlu0 %v1113, 20
        %v1244 = vpop.permute.xlu0 %1243
        %1245 = vrot.lane.b32.xlu0 %v1114, 20
        %v1246 = vpop.permute.xlu0 %1245
        %1247 = vrot.lane.b32.xlu0 %v1115, 20
        %v1248 = vpop.permute.xlu0 %1247
        %1249 = vrot.lane.b32.xlu0 %v1116, 20
        %v1250 = vpop.permute.xlu0 %1249
        %1251 = vrot.lane.b32.xlu0 %v1117, 20
        %v1252 = vpop.permute.xlu0 %1251
        %1253 = vrot.lane.b32.xlu0 %v1222, 20
        %v1254 = vpop.permute.xlu0 %1253
        %v1255 = vunpack.c.l.b16 %v321
        %v1256 = vunpack.c.l.b16 %v322
        %v1257 = vpack.c.b16 %v1256, %v1255
        %1258 = vrot.lane.b32.xlu0 %v976, 24
        %v1259 = vpop.permute.xlu0 %1258
        %1260 = vrot.lane.b32.xlu0 %v977, 24
        %v1261 = vpop.permute.xlu0 %1260
        %1262 = vrot.lane.b32.xlu0 %v978, 24
        %v1263 = vpop.permute.xlu0 %1262
        %1264 = vrot.lane.b32.xlu0 %v979, 24
        %v1265 = vpop.permute.xlu0 %1264
        %1266 = vrot.lane.b32.xlu0 %v980, 24
        %v1267 = vpop.permute.xlu0 %1266
        %1268 = vrot.lane.b32.xlu0 %v981, 24
        %v1269 = vpop.permute.xlu0 %1268
        %1270 = vrot.lane.b32.xlu0 %v982, 24
        %v1271 = vpop.permute.xlu0 %1270
        %1272 = vrot.lane.b32.xlu0 %v983, 24
        %v1273 = vpop.permute.xlu0 %1272
        %1274 = vrot.lane.b32.xlu0 %v984, 24
        %v1275 = vpop.permute.xlu0 %1274
        %1276 = vrot.lane.b32.xlu0 %v985, 24
        %v1277 = vpop.permute.xlu0 %1276
        %1278 = vrot.lane.b32.xlu0 %v986, 24
        %v1279 = vpop.permute.xlu0 %1278
        %1280 = vrot.lane.b32.xlu0 %v987, 24
        %v1281 = vpop.permute.xlu0 %1280
        %1282 = vrot.lane.b32.xlu0 %v988, 24
        %v1283 = vpop.permute.xlu0 %1282
        %1284 = vrot.lane.b32.xlu0 %v989, 24
        %v1285 = vpop.permute.xlu0 %1284
        %1286 = vrot.lane.b32.xlu0 %v1152, 24
        %v1287 = vpop.permute.xlu0 %1286
        %1288 = vrot.lane.b32.xlu0 %v1257, 24
        %v1289 = vpop.permute.xlu0 %1288
        %v1290 = vunpack.c.l.b16 %v921
        %v1291 = vunpack.c.l.b16 %v931
        %v1292 = vpack.c.b16 %v1291, %v1290
        %1293 = vrot.lane.b32.xlu0 %v1024, 28
        %v1294 = vpop.permute.xlu0 %1293
        %1295 = vrot.lane.b32.xlu0 %v1025, 28
        %v1296 = vpop.permute.xlu0 %1295
        %1297 = vrot.lane.b32.xlu0 %v1026, 28
        %v1298 = vpop.permute.xlu0 %1297
        %1299 = vrot.lane.b32.xlu0 %v1027, 28
        %v1300 = vpop.permute.xlu0 %1299
        %1301 = vrot.lane.b32.xlu0 %v1028, 28
        %v1302 = vpop.permute.xlu0 %1301
        %1303 = vrot.lane.b32.xlu0 %v1029, 28
        %v1304 = vpop.permute.xlu0 %1303
        %1305 = vrot.lane.b32.xlu0 %v1030, 28
        %v1306 = vpop.permute.xlu0 %1305
        %1307 = vrot.lane.b32.xlu0 %v1031, 28
        %v1308 = vpop.permute.xlu0 %1307
        %1309 = vrot.lane.b32.xlu0 %v1032, 28
        %v1310 = vpop.permute.xlu0 %1309
        %1311 = vrot.lane.b32.xlu0 %v1033, 28
        %v1312 = vpop.permute.xlu0 %1311
        %1313 = vrot.lane.b32.xlu0 %v1034, 28
        %v1314 = vpop.permute.xlu0 %1313
        %1315 = vrot.lane.b32.xlu0 %v1035, 28
        %v1316 = vpop.permute.xlu0 %1315
        %1317 = vrot.lane.b32.xlu0 %v1036, 28
        %v1318 = vpop.permute.xlu0 %1317
        %1319 = vrot.lane.b32.xlu0 %v1037, 28
        %v1320 = vpop.permute.xlu0 %1319
        %1321 = vrot.lane.b32.xlu0 %v1187, 28
        %v1322 = vpop.permute.xlu0 %1321
        %1323 = vrot.lane.b32.xlu0 %v1292, 28
        %v1324 = vpop.permute.xlu0 %1323
        %v1325 = vunpack.c.l.b16 %v938
        %v1326 = vunpack.c.l.b16 %v941
        %v1327 = vpack.c.b16 %v1326, %v1325
        %1328 = vrot.lane.b32.xlu0 %v1104, 32
        %v1329 = vpop.permute.xlu0 %1328
        %1330 = vrot.lane.b32.xlu0 %v1105, 32
        %v1331 = vpop.permute.xlu0 %1330
        %1332 = vrot.lane.b32.xlu0 %v1106, 32
        %v1333 = vpop.permute.xlu0 %1332
        %1334 = vrot.lane.b32.xlu0 %v1107, 32
        %v1335 = vpop.permute.xlu0 %1334
        %1336 = vrot.lane.b32.xlu0 %v1108, 32
        %v1337 = vpop.permute.xlu0 %1336
        %1338 = vrot.lane.b32.xlu0 %v1109, 32
        %v1339 = vpop.permute.xlu0 %1338
        %1340 = vrot.lane.b32.xlu0 %v1110, 32
        %v1341 = vpop.permute.xlu0 %1340
        %1342 = vrot.lane.b32.xlu0 %v1111, 32
        %v1343 = vpop.permute.xlu0 %1342
        %1344 = vrot.lane.b32.xlu0 %v1112, 32
        %v1345 = vpop.permute.xlu0 %1344
        %1346 = vrot.lane.b32.xlu0 %v1113, 32
        %v1347 = vpop.permute.xlu0 %1346
        %1348 = vrot.lane.b32.xlu0 %v1114, 32
        %v1349 = vpop.permute.xlu0 %1348
        %1350 = vrot.lane.b32.xlu0 %v1115, 32
        %v1351 = vpop.permute.xlu0 %1350
        %1352 = vrot.lane.b32.xlu0 %v1116, 32
        %v1353 = vpop.permute.xlu0 %1352
        %1354 = vrot.lane.b32.xlu0 %v1117, 32
        %v1355 = vpop.permute.xlu0 %1354
        %1356 = vrot.lane.b32.xlu0 %v1222, 32
        %v1357 = vpop.permute.xlu0 %1356
        %1358 = vrot.lane.b32.xlu0 %v1327, 32
        %v1359 = vpop.permute.xlu0 %1358
        %vm1360 = vcmask 31744
        %v1363 = vsel %vm1360, %v974, %v1039
        %v1366 = vsel %vm1360, %v975, %v1041
        %v1369 = vsel %vm1360, %v976, %v1043
        %v1372 = vsel %vm1360, %v977, %v1045
        %v1375 = vsel %vm1360, %v978, %v1047
        %v1378 = vsel %vm1360, %v979, %v1049
        %v1381 = vsel %vm1360, %v980, %v1051
        %v1384 = vsel %vm1360, %v981, %v1053
        %v1387 = vsel %vm1360, %v982, %v1055
        %v1390 = vsel %vm1360, %v983, %v1057
        %v1393 = vsel %vm1360, %v984, %v1059
        %v1396 = vsel %vm1360, %v985, %v1061
        %v1399 = vsel %vm1360, %v986, %v1063
        %v1402 = vsel %vm1360, %v987, %v1065
        %v1405 = vsel %vm1360, %v988, %v1067
        %v1408 = vsel %vm1360, %v989, %v1069
        %vm1409 = vcmask 64512
        %v1411 = vsel %vm1409, %v1363, %v1119
        %v1413 = vsel %vm1409, %v1366, %v1121
        %v1415 = vsel %vm1409, %v1369, %v1123
        %v1417 = vsel %vm1409, %v1372, %v1125
        %v1419 = vsel %vm1409, %v1375, %v1127
        %v1421 = vsel %vm1409, %v1378, %v1129
        %v1423 = vsel %vm1409, %v1381, %v1131
        %v1425 = vsel %vm1409, %v1384, %v1133
        %v1427 = vsel %vm1409, %v1387, %v1135
        %v1429 = vsel %vm1409, %v1390, %v1137
        %v1431 = vsel %vm1409, %v1393, %v1139
        %v1433 = vsel %vm1409, %v1396, %v1141
        %v1435 = vsel %vm1409, %v1399, %v1143
        %v1437 = vsel %vm1409, %v1402, %v1145
        %v1439 = vsel %vm1409, %v1405, %v1147
        %v1441 = vsel %vm1409, %v1408, %v1149
        %vm1442 = vcmask 97280
        %v1444 = vsel %vm1442, %v1411, %v1154
        %v1446 = vsel %vm1442, %v1413, %v1156
        %v1448 = vsel %vm1442, %v1415, %v1158
        %v1450 = vsel %vm1442, %v1417, %v1160
        %v1452 = vsel %vm1442, %v1419, %v1162
        %v1454 = vsel %vm1442, %v1421, %v1164
        %v1456 = vsel %vm1442, %v1423, %v1166
        %v1458 = vsel %vm1442, %v1425, %v1168
        %v1460 = vsel %vm1442, %v1427, %v1170
        %v1462 = vsel %vm1442, %v1429, %v1172
        %v1464 = vsel %vm1442, %v1431, %v1174
        %v1466 = vsel %vm1442, %v1433, %v1176
        %v1468 = vsel %vm1442, %v1435, %v1178
        %v1470 = vsel %vm1442, %v1437, %v1180
        %v1472 = vsel %vm1442, %v1439, %v1182
        %v1474 = vsel %vm1442, %v1441, %v1184
        %vm1475 = vcmask 130048
        %v1477 = vsel %vm1475, %v1444, %v1189
        %v1479 = vsel %vm1475, %v1446, %v1191
        %v1481 = vsel %vm1475, %v1448, %v1193
        %v1483 = vsel %vm1475, %v1450, %v1195
        %v1485 = vsel %vm1475, %v1452, %v1197
        %v1487 = vsel %vm1475, %v1454, %v1199
        %v1489 = vsel %vm1475, %v1456, %v1201
        %v1491 = vsel %vm1475, %v1458, %v1203
        %v1493 = vsel %vm1475, %v1460, %v1205
        %v1495 = vsel %vm1475, %v1462, %v1207
        %v1497 = vsel %vm1475, %v1464, %v1209
        %v1499 = vsel %vm1475, %v1466, %v1211
        %v1501 = vsel %vm1475, %v1468, %v1213
        %v1503 = vsel %vm1475, %v1470, %v1215
        %v1505 = vsel %vm1475, %v1472, %v1217
        %v1507 = vsel %vm1475, %v1474, %v1219
        %vm1508 = vcmask 162816
        %v1510 = vsel %vm1508, %v1477, %v1224
        %v1512 = vsel %vm1508, %v1479, %v1226
        %v1514 = vsel %vm1508, %v1481, %v1228
        %v1516 = vsel %vm1508, %v1483, %v1230
        %v1518 = vsel %vm1508, %v1485, %v1232
        %v1520 = vsel %vm1508, %v1487, %v1234
        %v1522 = vsel %vm1508, %v1489, %v1236
        %v1524 = vsel %vm1508, %v1491, %v1238
        %v1526 = vsel %vm1508, %v1493, %v1240
        %v1528 = vsel %vm1508, %v1495, %v1242
        %v1530 = vsel %vm1508, %v1497, %v1244
        %v1532 = vsel %vm1508, %v1499, %v1246
        %v1534 = vsel %vm1508, %v1501, %v1248
        %v1536 = vsel %vm1508, %v1503, %v1250
        %v1538 = vsel %vm1508, %v1505, %v1252
        %v1540 = vsel %vm1508, %v1507, %v1254
        %vm1541 = vcmask 195584
        %v1543 = vsel %vm1541, %v1510, %v1259
        %v1545 = vsel %vm1541, %v1512, %v1261
        %v1547 = vsel %vm1541, %v1514, %v1263
        %v1549 = vsel %vm1541, %v1516, %v1265
        %v1551 = vsel %vm1541, %v1518, %v1267
        %v1553 = vsel %vm1541, %v1520, %v1269
        %v1555 = vsel %vm1541, %v1522, %v1271
        %v1557 = vsel %vm1541, %v1524, %v1273
        %v1559 = vsel %vm1541, %v1526, %v1275
        %v1561 = vsel %vm1541, %v1528, %v1277
        %v1563 = vsel %vm1541, %v1530, %v1279
        %v1565 = vsel %vm1541, %v1532, %v1281
        %v1567 = vsel %vm1541, %v1534, %v1283
        %v1569 = vsel %vm1541, %v1536, %v1285
        %v1571 = vsel %vm1541, %v1538, %v1287
        %v1573 = vsel %vm1541, %v1540, %v1289
        %vm1574 = vcmask 228352
        %v1576 = vsel %vm1574, %v1543, %v1294
        %v1578 = vsel %vm1574, %v1545, %v1296
        %v1580 = vsel %vm1574, %v1547, %v1298
        %v1582 = vsel %vm1574, %v1549, %v1300
        %v1584 = vsel %vm1574, %v1551, %v1302
        %v1586 = vsel %vm1574, %v1553, %v1304
        %v1588 = vsel %vm1574, %v1555, %v1306
        %v1590 = vsel %vm1574, %v1557, %v1308
        %v1592 = vsel %vm1574, %v1559, %v1310
        %v1594 = vsel %vm1574, %v1561, %v1312
        %v1596 = vsel %vm1574, %v1563, %v1314
        %v1598 = vsel %vm1574, %v1565, %v1316
        %v1600 = vsel %vm1574, %v1567, %v1318
        %v1602 = vsel %vm1574, %v1569, %v1320
        %v1604 = vsel %vm1574, %v1571, %v1322
        %v1606 = vsel %vm1574, %v1573, %v1324
        %vm1607 = vcmask 261120
        %v1609 = vsel %vm1607, %v1576, %v1329
        %v1611 = vsel %vm1607, %v1578, %v1331
        %v1613 = vsel %vm1607, %v1580, %v1333
        %v1615 = vsel %vm1607, %v1582, %v1335
        %v1617 = vsel %vm1607, %v1584, %v1337
        %v1619 = vsel %vm1607, %v1586, %v1339
        %v1621 = vsel %vm1607, %v1588, %v1341
        %v1623 = vsel %vm1607, %v1590, %v1343
        %v1625 = vsel %vm1607, %v1592, %v1345
        %v1627 = vsel %vm1607, %v1594, %v1347
        %v1629 = vsel %vm1607, %v1596, %v1349
        %v1631 = vsel %vm1607, %v1598, %v1351
        %v1633 = vsel %vm1607, %v1600, %v1353
        %v1635 = vsel %vm1607, %v1602, %v1355
        %v1637 = vsel %vm1607, %v1604, %v1357
        %v1639 = vsel %vm1607, %v1606, %v1359
        %v1640 = vld [vmem:[%s1] sm:$0xff]
        %v1641 = vld [vmem:[%s1 + $0x8] sm:$0xff]
        %v1642 = vld [vmem:[%s1 + $0x10] sm:$0xff]
        %v1643 = vld [vmem:[%s1 + $0x18] sm:$0xff]
        %v1644 = vld [vmem:[%s1 + $0x20] sm:$0x33]
        %v1650 = vunpack.c.l.b16 %v1640
        %v1651 = vunpack.c.h.b16 %v1640
        %v1652 = vunpack.c.l.b16 %v1641
        %v1653 = vunpack.c.h.b16 %v1641
        %v1654 = vunpack.c.l.b16 %v1642
        %v1655 = vunpack.c.h.b16 %v1642
        %v1656 = vunpack.c.l.b16 %v1643
        %v1657 = vunpack.c.h.b16 %v1643
        %v1658 = vunpack.c.l.b16 %v1644
        %v1659 = vunpack.c.h.b16 %v1644
        %v1660 = vpack.c.b16 %v1652, %v1650
        %v1661 = vpack.c.b16 %v1653, %v1651
        %v1662 = vpack.c.b16 %v1656, %v1654
        %v1663 = vpack.c.b16 %v1657, %v1655
        %v1664 = vpack.c.b16 %v1658, %v1658
        %v1665 = vpack.c.b16 %v1659, %v1659
        %vm1670 = vcmask 293888
        %v1671 = vsel %vm1670, %v1609, 0
        %v1673 = vsel %vm1670, %v1611, 0
        %v1675 = vsel %vm1670, %v1613, 0
        %v1677 = vsel %vm1670, %v1615, 0
        %v1679 = vsel %vm1670, %v1617, 0
        %v1681 = vsel %vm1670, %v1619, 0
        %v1683 = vsel %vm1670, %v1621, 0
        %v1685 = vsel %vm1670, %v1623, 0
        %v1687 = vsel %vm1670, %v1625, 0
        %v1689 = vsel %vm1670, %v1627, 0
        %v1691 = vsel %vm1670, %v1629, 0
        %v1693 = vsel %vm1670, %v1631, 0
        %v1695 = vsel %vm1670, %v1633, 0
        %v1697 = vsel %vm1670, %v1635, 0
        %v1699 = vsel %vm1670, %v1637, 0
        %v1701 = vsel %vm1670, %v1639, 0
        %vm1703 = vcmask 1041408
        %v1705 = vsel %vm1703, %v1664, 0
        %v1708 = vsel %vm1703, %v1665, 0
        %1710 = vmatprep.subr.bf16.mxu0 0
        %1711 = vmatpush1.bf16.msra.mxu0 0
        %1712 = vmatprep.subr.bf16.mxu0 0
        %1713 = vmatpush1.bf16.msra.mxu0 0
        %1714 = vmatprep.subr.bf16.mxu0 0
        %1715 = vmatpush1.bf16.msra.mxu0 0
        %1716 = vmatprep.subr.bf16.mxu0 0
        %1717 = vmatpush1.bf16.msra.mxu0 0
        %1718 = vmatprep.subr.bf16.mxu0 0
        %1719 = vmatpush1.bf16.msra.mxu0 0
        %1720 = vmatprep.subr.bf16.mxu0 %v1708
        %1721 = vmatpush1.bf16.msra.mxu0 %v1705
        %1722 = vmatprep.subr.bf16.mxu0 %v1663
        %1723 = vmatpush1.bf16.msra.mxu0 %v1662
        %1724 = vmatprep.subr.bf16.mxu0 %v1661
        %1725 = vmatpush1.bf16.msra.mxu0 %v1660
        %1726 = vmatprep.subr.bf16.mxu0 0
        %1727 = vmatpush2.bf16.msra.mxu0 0
        %1728 = vmatprep.subr.bf16.mxu0 0
        %1729 = vmatpush2.bf16.msra.mxu0 0
        %1730 = vmatprep.subr.bf16.mxu0 0
        %1731 = vmatpush2.bf16.msra.mxu0 0
        %1732 = vmatprep.subr.bf16.mxu0 0
        %1733 = vmatpush2.bf16.msra.mxu0 0
        %1734 = vmatprep.subr.bf16.mxu0 0
        %1735 = vmatpush2.bf16.msra.mxu0 0
        %1736 = vmatprep.subr.bf16.mxu0 0
        %1737 = vmatpush2.bf16.msra.mxu0 0
        %1738 = vmatprep.subr.bf16.mxu0 0
        %1739 = vmatpush2.bf16.msra.mxu0 0
        %1740 = vmatprep.subr.bf16.mxu0 0
        %1741 = vmatpush2.bf16.msra.mxu0 0
        %1742 = vmatprep.mubr.bf16.mxu0 0
        %1743 = vmatmul.mubr.bf16.gmra.mxu0 %v1671
        %v1744 = vpop.f32.mrf.mxu0
        %v1745 = vadd.f32 0.0, %v1744
        %v1746 = vpop.f32.mrf.mxu0
        %v1747 = vadd.f32 0.0, %v1746
        %v1748 = vpop.f32.mrf.mxu0
        %v1749 = vadd.f32 0.0, %v1748
        %v1750 = vpop.f32.mrf.mxu0
        %v1751 = vadd.f32 0.0, %v1750
        %1752 = vmatprep.mubr.bf16.mxu0 0
        %1753 = vmatmul.mubr.bf16.gmra.mxu0 %v1673
        %v1754 = vpop.f32.mrf.mxu0
        %v1755 = vadd.f32 0.0, %v1754
        %v1756 = vpop.f32.mrf.mxu0
        %v1757 = vadd.f32 0.0, %v1756
        %v1758 = vpop.f32.mrf.mxu0
        %v1759 = vadd.f32 0.0, %v1758
        %v1760 = vpop.f32.mrf.mxu0
        %v1761 = vadd.f32 0.0, %v1760
        %1762 = vmatprep.mubr.bf16.mxu0 0
        %1763 = vmatmul.mubr.bf16.gmra.mxu0 %v1675
        %v1764 = vpop.f32.mrf.mxu0
        %v1765 = vadd.f32 0.0, %v1764
        %v1766 = vpop.f32.mrf.mxu0
        %v1767 = vadd.f32 0.0, %v1766
        %v1768 = vpop.f32.mrf.mxu0
        %v1769 = vadd.f32 0.0, %v1768
        %v1770 = vpop.f32.mrf.mxu0
        %v1771 = vadd.f32 0.0, %v1770
        %1772 = vmatprep.mubr.bf16.mxu0 0
        %1773 = vmatmul.mubr.bf16.gmra.mxu0 %v1677
        %v1774 = vpop.f32.mrf.mxu0
        %v1775 = vadd.f32 0.0, %v1774
        %v1776 = vpop.f32.mrf.mxu0
        %v1777 = vadd.f32 0.0, %v1776
        %v1778 = vpop.f32.mrf.mxu0
        %v1779 = vadd.f32 0.0, %v1778
        %v1780 = vpop.f32.mrf.mxu0
        %v1781 = vadd.f32 0.0, %v1780
        %1782 = vmatprep.mubr.bf16.mxu0 0
        %1783 = vmatmul.mubr.bf16.gmra.mxu0 %v1679
        %v1784 = vpop.f32.mrf.mxu0
        %v1785 = vadd.f32 0.0, %v1784
        %v1786 = vpop.f32.mrf.mxu0
        %v1787 = vadd.f32 0.0, %v1786
        %v1788 = vpop.f32.mrf.mxu0
        %v1789 = vadd.f32 0.0, %v1788
        %v1790 = vpop.f32.mrf.mxu0
        %v1791 = vadd.f32 0.0, %v1790
        %1792 = vmatprep.mubr.bf16.mxu0 0
        %1793 = vmatmul.mubr.bf16.gmra.mxu0 %v1681
        %v1794 = vpop.f32.mrf.mxu0
        %v1795 = vadd.f32 0.0, %v1794
        %v1796 = vpop.f32.mrf.mxu0
        %v1797 = vadd.f32 0.0, %v1796
        %v1798 = vpop.f32.mrf.mxu0
        %v1799 = vadd.f32 0.0, %v1798
        %v1800 = vpop.f32.mrf.mxu0
        %v1801 = vadd.f32 0.0, %v1800
        %1802 = vmatprep.mubr.bf16.mxu0 0
        %1803 = vmatmul.mubr.bf16.gmra.mxu0 %v1683
        %v1804 = vpop.f32.mrf.mxu0
        %v1805 = vadd.f32 0.0, %v1804
        %v1806 = vpop.f32.mrf.mxu0
        %v1807 = vadd.f32 0.0, %v1806
        %v1808 = vpop.f32.mrf.mxu0
        %v1809 = vadd.f32 0.0, %v1808
        %v1810 = vpop.f32.mrf.mxu0
        %v1811 = vadd.f32 0.0, %v1810
        %1812 = vmatprep.mubr.bf16.mxu0 0
        %1813 = vmatmul.mubr.bf16.gmra.mxu0 %v1685
        %v1814 = vpop.f32.mrf.mxu0
        %v1815 = vadd.f32 0.0, %v1814
        %v1816 = vpop.f32.mrf.mxu0
        %v1817 = vadd.f32 0.0, %v1816
        %v1818 = vpop.f32.mrf.mxu0
        %v1819 = vadd.f32 0.0, %v1818
        %v1820 = vpop.f32.mrf.mxu0
        %v1821 = vadd.f32 0.0, %v1820
        %1822 = vmatprep.mubr.bf16.mxu0 0
        %1823 = vmatmul.mubr.bf16.gmra.mxu0 %v1687
        %v1824 = vpop.f32.mrf.mxu0
        %v1825 = vadd.f32 0.0, %v1824
        %v1826 = vpop.f32.mrf.mxu0
        %v1827 = vadd.f32 0.0, %v1826
        %v1828 = vpop.f32.mrf.mxu0
        %v1829 = vadd.f32 0.0, %v1828
        %v1830 = vpop.f32.mrf.mxu0
        %v1831 = vadd.f32 0.0, %v1830
        %1832 = vmatprep.mubr.bf16.mxu0 0
        %1833 = vmatmul.mubr.bf16.gmra.mxu0 %v1689
        %v1834 = vpop.f32.mrf.mxu0
        %v1835 = vadd.f32 0.0, %v1834
        %v1836 = vpop.f32.mrf.mxu0
        %v1837 = vadd.f32 0.0, %v1836
        %v1838 = vpop.f32.mrf.mxu0
        %v1839 = vadd.f32 0.0, %v1838
        %v1840 = vpop.f32.mrf.mxu0
        %v1841 = vadd.f32 0.0, %v1840
        %1842 = vmatprep.mubr.bf16.mxu0 0
        %1843 = vmatmul.mubr.bf16.gmra.mxu0 %v1691
        %v1844 = vpop.f32.mrf.mxu0
        %v1845 = vadd.f32 0.0, %v1844
        %v1846 = vpop.f32.mrf.mxu0
        %v1847 = vadd.f32 0.0, %v1846
        %v1848 = vpop.f32.mrf.mxu0
        %v1849 = vadd.f32 0.0, %v1848
        %v1850 = vpop.f32.mrf.mxu0
        %v1851 = vadd.f32 0.0, %v1850
        %1852 = vmatprep.mubr.bf16.mxu0 0
        %1853 = vmatmul.mubr.bf16.gmra.mxu0 %v1693
        %v1854 = vpop.f32.mrf.mxu0
        %v1855 = vadd.f32 0.0, %v1854
        %v1856 = vpop.f32.mrf.mxu0
        %v1857 = vadd.f32 0.0, %v1856
        %v1858 = vpop.f32.mrf.mxu0
        %v1859 = vadd.f32 0.0, %v1858
        %v1860 = vpop.f32.mrf.mxu0
        %v1861 = vadd.f32 0.0, %v1860
        %1862 = vmatprep.mubr.bf16.mxu0 0
        %1863 = vmatmul.mubr.bf16.gmra.mxu0 %v1695
        %v1864 = vpop.f32.mrf.mxu0
        %v1865 = vadd.f32 0.0, %v1864
        %v1866 = vpop.f32.mrf.mxu0
        %v1867 = vadd.f32 0.0, %v1866
        %v1868 = vpop.f32.mrf.mxu0
        %v1869 = vadd.f32 0.0, %v1868
        %v1870 = vpop.f32.mrf.mxu0
        %v1871 = vadd.f32 0.0, %v1870
        %1872 = vmatprep.mubr.bf16.mxu0 0
        %1873 = vmatmul.mubr.bf16.gmra.mxu0 %v1697
        %v1874 = vpop.f32.mrf.mxu0
        %v1875 = vadd.f32 0.0, %v1874
        %v1876 = vpop.f32.mrf.mxu0
        %v1877 = vadd.f32 0.0, %v1876
        %v1878 = vpop.f32.mrf.mxu0
        %v1879 = vadd.f32 0.0, %v1878
        %v1880 = vpop.f32.mrf.mxu0
        %v1881 = vadd.f32 0.0, %v1880
        %1882 = vmatprep.mubr.bf16.mxu0 0
        %1883 = vmatmul.mubr.bf16.gmra.mxu0 %v1699
        %v1884 = vpop.f32.mrf.mxu0
        %v1885 = vadd.f32 0.0, %v1884
        %v1886 = vpop.f32.mrf.mxu0
        %v1887 = vadd.f32 0.0, %v1886
        %v1888 = vpop.f32.mrf.mxu0
        %v1889 = vadd.f32 0.0, %v1888
        %v1890 = vpop.f32.mrf.mxu0
        %v1891 = vadd.f32 0.0, %v1890
        %1892 = vmatprep.mubr.bf16.mxu0 0
        %1893 = vmatmul.mubr.bf16.gmra.mxu0 %v1701
        %v1894 = vpop.f32.mrf.mxu0
        %v1895 = vadd.f32 0.0, %v1894
        %v1896 = vpop.f32.mrf.mxu0
        %v1897 = vadd.f32 0.0, %v1896
        %v1898 = vpop.f32.mrf.mxu0
        %v1899 = vadd.f32 0.0, %v1898
        %v1900 = vpop.f32.mrf.mxu0
        %v1901 = vadd.f32 0.0, %v1900
        %1902 = vdwg.mxu0
        %v1903 = vld [vmem:[%s2] sm:$0x3]
        %v1905 = vlaneseq
        %v1906 = vshrl.u32 %v1905, 7
        %v1907 = vsub.s32 0, %v1906
        %v1908 = vrot.slane %v1903, %v1907
        %v1909 = vlaneseq
        %v1910 = vshrl.u32 %v1909, 7
        %v1911 = vsub.s32 1, %v1910
        %v1912 = vrot.slane %v1903, %v1911
        %v1915 = vmul.f32 %v1745, %v1908
        %v1916 = vmul.f32 %v1747, %v1912
        %v1917 = vmul.f32 %v1749, %v1908
        %v1918 = vmul.f32 %v1751, %v1912
        %v1919 = vmul.f32 %v1755, %v1908
        %v1920 = vmul.f32 %v1757, %v1912
        %v1921 = vmul.f32 %v1759, %v1908
        %v1922 = vmul.f32 %v1761, %v1912
        %v1923 = vmul.f32 %v1765, %v1908
        %v1924 = vmul.f32 %v1767, %v1912
        %v1925 = vmul.f32 %v1769, %v1908
        %v1926 = vmul.f32 %v1771, %v1912
        %v1927 = vmul.f32 %v1775, %v1908
        %v1928 = vmul.f32 %v1777, %v1912
        %v1929 = vmul.f32 %v1779, %v1908
        %v1930 = vmul.f32 %v1781, %v1912
        %v1931 = vmul.f32 %v1785, %v1908
        %v1932 = vmul.f32 %v1787, %v1912
        %v1933 = vmul.f32 %v1789, %v1908
        %v1934 = vmul.f32 %v1791, %v1912
        %v1935 = vmul.f32 %v1795, %v1908
        %v1936 = vmul.f32 %v1797, %v1912
        %v1937 = vmul.f32 %v1799, %v1908
        %v1938 = vmul.f32 %v1801, %v1912
        %v1939 = vmul.f32 %v1805, %v1908
        %v1940 = vmul.f32 %v1807, %v1912
        %v1941 = vmul.f32 %v1809, %v1908
        %v1942 = vmul.f32 %v1811, %v1912
        %v1943 = vmul.f32 %v1815, %v1908
        %v1944 = vmul.f32 %v1817, %v1912
        %v1945 = vmul.f32 %v1819, %v1908
        %v1946 = vmul.f32 %v1821, %v1912
        %v1947 = vmul.f32 %v1825, %v1908
        %v1948 = vmul.f32 %v1827, %v1912
        %v1949 = vmul.f32 %v1829, %v1908
        %v1950 = vmul.f32 %v1831, %v1912
        %v1951 = vmul.f32 %v1835, %v1908
        %v1952 = vmul.f32 %v1837, %v1912
        %v1953 = vmul.f32 %v1839, %v1908
        %v1954 = vmul.f32 %v1841, %v1912
        %v1955 = vmul.f32 %v1845, %v1908
        %v1956 = vmul.f32 %v1847, %v1912
        %v1957 = vmul.f32 %v1849, %v1908
        %v1958 = vmul.f32 %v1851, %v1912
        %v1959 = vmul.f32 %v1855, %v1908
        %v1960 = vmul.f32 %v1857, %v1912
        %v1961 = vmul.f32 %v1859, %v1908
        %v1962 = vmul.f32 %v1861, %v1912
        %v1963 = vmul.f32 %v1865, %v1908
        %v1964 = vmul.f32 %v1867, %v1912
        %v1965 = vmul.f32 %v1869, %v1908
        %v1966 = vmul.f32 %v1871, %v1912
        %v1967 = vmul.f32 %v1875, %v1908
        %v1968 = vmul.f32 %v1877, %v1912
        %v1969 = vmul.f32 %v1879, %v1908
        %v1970 = vmul.f32 %v1881, %v1912
        %v1971 = vmul.f32 %v1885, %v1908
        %v1972 = vmul.f32 %v1887, %v1912
        %v1973 = vmul.f32 %v1889, %v1908
        %v1974 = vmul.f32 %v1891, %v1912
        %v1975 = vmul.f32 %v1895, %v1908
        %v1976 = vmul.f32 %v1897, %v1912
        %v1977 = vmul.f32 %v1899, %v1908
        %v1978 = vmul.f32 %v1901, %v1912
        %v1979 = vld [vmem:[%s3] sm:$0x3]
        %v1981 = vlaneseq
        %v1982 = vshrl.u32 %v1981, 7
        %v1983 = vsub.s32 0, %v1982
        %v1984 = vrot.slane %v1979, %v1983
        %v1985 = vlaneseq
        %v1986 = vshrl.u32 %v1985, 7
        %v1987 = vsub.s32 1, %v1986
        %v1988 = vrot.slane %v1979, %v1987
        %v1991 = vadd.f32 %v1915, %v1984
        %v1992 = vadd.f32 %v1916, %v1988
        %v1993 = vadd.f32 %v1917, %v1984
        %v1994 = vadd.f32 %v1918, %v1988
        %v1995 = vadd.f32 %v1919, %v1984
        %v1996 = vadd.f32 %v1920, %v1988
        %v1997 = vadd.f32 %v1921, %v1984
        %v1998 = vadd.f32 %v1922, %v1988
        %v1999 = vadd.f32 %v1923, %v1984
        %v2000 = vadd.f32 %v1924, %v1988
        %v2001 = vadd.f32 %v1925, %v1984
        %v2002 = vadd.f32 %v1926, %v1988
        %v2003 = vadd.f32 %v1927, %v1984
        %v2004 = vadd.f32 %v1928, %v1988
        %v2005 = vadd.f32 %v1929, %v1984
        %v2006 = vadd.f32 %v1930, %v1988
        %v2007 = vadd.f32 %v1931, %v1984
        %v2008 = vadd.f32 %v1932, %v1988
        %v2009 = vadd.f32 %v1933, %v1984
        %v2010 = vadd.f32 %v1934, %v1988
        %v2011 = vadd.f32 %v1935, %v1984
        %v2012 = vadd.f32 %v1936, %v1988
        %v2013 = vadd.f32 %v1937, %v1984
        %v2014 = vadd.f32 %v1938, %v1988
        %v2015 = vadd.f32 %v1939, %v1984
        %v2016 = vadd.f32 %v1940, %v1988
        %v2017 = vadd.f32 %v1941, %v1984
        %v2018 = vadd.f32 %v1942, %v1988
        %v2019 = vadd.f32 %v1943, %v1984
        %v2020 = vadd.f32 %v1944, %v1988
        %v2021 = vadd.f32 %v1945, %v1984
        %v2022 = vadd.f32 %v1946, %v1988
        %v2023 = vadd.f32 %v1947, %v1984
        %v2024 = vadd.f32 %v1948, %v1988
        %v2025 = vadd.f32 %v1949, %v1984
        %v2026 = vadd.f32 %v1950, %v1988
        %v2027 = vadd.f32 %v1951, %v1984
        %v2028 = vadd.f32 %v1952, %v1988
        %v2029 = vadd.f32 %v1953, %v1984
        %v2030 = vadd.f32 %v1954, %v1988
        %v2031 = vadd.f32 %v1955, %v1984
        %v2032 = vadd.f32 %v1956, %v1988
        %v2033 = vadd.f32 %v1957, %v1984
        %v2034 = vadd.f32 %v1958, %v1988
        %v2035 = vadd.f32 %v1959, %v1984
        %v2036 = vadd.f32 %v1960, %v1988
        %v2037 = vadd.f32 %v1961, %v1984
        %v2038 = vadd.f32 %v1962, %v1988
        %v2039 = vadd.f32 %v1963, %v1984
        %v2040 = vadd.f32 %v1964, %v1988
        %v2041 = vadd.f32 %v1965, %v1984
        %v2042 = vadd.f32 %v1966, %v1988
        %v2043 = vadd.f32 %v1967, %v1984
        %v2044 = vadd.f32 %v1968, %v1988
        %v2045 = vadd.f32 %v1969, %v1984
        %v2046 = vadd.f32 %v1970, %v1988
        %v2047 = vadd.f32 %v1971, %v1984
        %v2048 = vadd.f32 %v1972, %v1988
        %v2049 = vadd.f32 %v1973, %v1984
        %v2050 = vadd.f32 %v1974, %v1988
        %v2051 = vadd.f32 %v1975, %v1984
        %v2052 = vadd.f32 %v1976, %v1988
        %v2053 = vadd.f32 %v1977, %v1984
        %v2054 = vadd.f32 %v1978, %v1988
        %v2055 = vmax.f32 %v1991, 0.0
        %v2056 = vmax.f32 %v1992, 0.0
        %v2057 = vmax.f32 %v1993, 0.0
        %v2058 = vmax.f32 %v1994, 0.0
        %v2059 = vmax.f32 %v1995, 0.0
        %v2060 = vmax.f32 %v1996, 0.0
        %v2061 = vmax.f32 %v1997, 0.0
        %v2062 = vmax.f32 %v1998, 0.0
        %v2063 = vmax.f32 %v1999, 0.0
        %v2064 = vmax.f32 %v2000, 0.0
        %v2065 = vmax.f32 %v2001, 0.0
        %v2066 = vmax.f32 %v2002, 0.0
        %v2067 = vmax.f32 %v2003, 0.0
        %v2068 = vmax.f32 %v2004, 0.0
        %v2069 = vmax.f32 %v2005, 0.0
        %v2070 = vmax.f32 %v2006, 0.0
        %v2071 = vmax.f32 %v2007, 0.0
        %v2072 = vmax.f32 %v2008, 0.0
        %v2073 = vmax.f32 %v2009, 0.0
        %v2074 = vmax.f32 %v2010, 0.0
        %v2075 = vmax.f32 %v2011, 0.0
        %v2076 = vmax.f32 %v2012, 0.0
        %v2077 = vmax.f32 %v2013, 0.0
        %v2078 = vmax.f32 %v2014, 0.0
        %v2079 = vmax.f32 %v2015, 0.0
        %v2080 = vmax.f32 %v2016, 0.0
        %v2081 = vmax.f32 %v2017, 0.0
        %v2082 = vmax.f32 %v2018, 0.0
        %v2083 = vmax.f32 %v2019, 0.0
        %v2084 = vmax.f32 %v2020, 0.0
        %v2085 = vmax.f32 %v2021, 0.0
        %v2086 = vmax.f32 %v2022, 0.0
        %v2087 = vmax.f32 %v2023, 0.0
        %v2088 = vmax.f32 %v2024, 0.0
        %v2089 = vmax.f32 %v2025, 0.0
        %v2090 = vmax.f32 %v2026, 0.0
        %v2091 = vmax.f32 %v2027, 0.0
        %v2092 = vmax.f32 %v2028, 0.0
        %v2093 = vmax.f32 %v2029, 0.0
        %v2094 = vmax.f32 %v2030, 0.0
        %v2095 = vmax.f32 %v2031, 0.0
        %v2096 = vmax.f32 %v2032, 0.0
        %v2097 = vmax.f32 %v2033, 0.0
        %v2098 = vmax.f32 %v2034, 0.0
        %v2099 = vmax.f32 %v2035, 0.0
        %v2100 = vmax.f32 %v2036, 0.0
        %v2101 = vmax.f32 %v2037, 0.0
        %v2102 = vmax.f32 %v2038, 0.0
        %v2103 = vmax.f32 %v2039, 0.0
        %v2104 = vmax.f32 %v2040, 0.0
        %v2105 = vmax.f32 %v2041, 0.0
        %v2106 = vmax.f32 %v2042, 0.0
        %v2107 = vmax.f32 %v2043, 0.0
        %v2108 = vmax.f32 %v2044, 0.0
        %v2109 = vmax.f32 %v2045, 0.0
        %v2110 = vmax.f32 %v2046, 0.0
        %v2111 = vmax.f32 %v2047, 0.0
        %v2112 = vmax.f32 %v2048, 0.0
        %v2113 = vmax.f32 %v2049, 0.0
        %v2114 = vmax.f32 %v2050, 0.0
        %v2115 = vmax.f32 %v2051, 0.0
        %v2116 = vmax.f32 %v2052, 0.0
        %v2117 = vmax.f32 %v2053, 0.0
        %v2118 = vmax.f32 %v2054, 0.0
        %v2119 = vpack.c.bf16 %v2057, %v2055
        %v2120 = vpack.c.bf16 %v2058, %v2056
        %v2121 = vpack.c.bf16 %v2061, %v2059
        %v2122 = vpack.c.bf16 %v2062, %v2060
        %v2123 = vpack.c.bf16 %v2065, %v2063
        %v2124 = vpack.c.bf16 %v2066, %v2064
        %v2125 = vpack.c.bf16 %v2069, %v2067
        %v2126 = vpack.c.bf16 %v2070, %v2068
        %v2127 = vpack.c.bf16 %v2073, %v2071
        %v2128 = vpack.c.bf16 %v2074, %v2072
        %v2129 = vpack.c.bf16 %v2077, %v2075
        %v2130 = vpack.c.bf16 %v2078, %v2076
        %v2131 = vpack.c.bf16 %v2081, %v2079
        %v2132 = vpack.c.bf16 %v2082, %v2080
        %v2133 = vpack.c.bf16 %v2085, %v2083
        %v2134 = vpack.c.bf16 %v2086, %v2084
        %v2135 = vpack.c.bf16 %v2089, %v2087
        %v2136 = vpack.c.bf16 %v2090, %v2088
        %v2137 = vpack.c.bf16 %v2093, %v2091
        %v2138 = vpack.c.bf16 %v2094, %v2092
        %v2139 = vpack.c.bf16 %v2097, %v2095
        %v2140 = vpack.c.bf16 %v2098, %v2096
        %v2141 = vpack.c.bf16 %v2101, %v2099
        %v2142 = vpack.c.bf16 %v2102, %v2100
        %v2143 = vpack.c.bf16 %v2105, %v2103
        %v2144 = vpack.c.bf16 %v2106, %v2104
        %v2145 = vpack.c.bf16 %v2109, %v2107
        %v2146 = vpack.c.bf16 %v2110, %v2108
        %v2147 = vpack.c.bf16 %v2113, %v2111
        %v2148 = vpack.c.bf16 %v2114, %v2112
        %v2149 = vpack.c.bf16 %v2117, %v2115
        %v2150 = vpack.c.bf16 %v2118, %v2116
        %v2151 = vld [vmem:[%s4] sm:$0xf]
        %v2152 = vld [vmem:[%s4 + $0x4] sm:$0xf]
        %v2153 = vld [vmem:[%s4 + $0x8] sm:$0xf]
        %v2154 = vld [vmem:[%s4 + $0xc] sm:$0xf]
        %v2155 = vld [vmem:[%s4 + $0x10] sm:$0xf]
        %v2156 = vld [vmem:[%s4 + $0x14] sm:$0xf]
        %v2157 = vld [vmem:[%s4 + $0x18] sm:$0xf]
        %v2158 = vld [vmem:[%s4 + $0x1c] sm:$0xf]
        %v2159 = vld [vmem:[%s4 + $0x20] sm:$0xf]
        %v2160 = vld [vmem:[%s4 + $0x24] sm:$0xf]
        %v2161 = vld [vmem:[%s4 + $0x28] sm:$0xf]
        %v2162 = vld [vmem:[%s4 + $0x2c] sm:$0xf]
        %v2163 = vld [vmem:[%s4 + $0x30] sm:$0xf]
        %v2164 = vld [vmem:[%s4 + $0x34] sm:$0xf]
        %v2165 = vld [vmem:[%s4 + $0x38] sm:$0xf]
        %v2166 = vld [vmem:[%s4 + $0x3c] sm:$0xf]
        %v2167 = vld [vmem:[%s4 + $0x40] sm:$0xf]
        %v2168 = vld [vmem:[%s4 + $0x44] sm:$0xf]
        %v2169 = vld [vmem:[%s4 + $0x48] sm:$0xf]
        %v2170 = vld [vmem:[%s4 + $0x4c] sm:$0xf]
        %v2171 = vld [vmem:[%s4 + $0x50] sm:$0xf]
        %v2172 = vld [vmem:[%s4 + $0x54] sm:$0xf]
        %v2173 = vld [vmem:[%s4 + $0x58] sm:$0xf]
        %v2174 = vld [vmem:[%s4 + $0x5c] sm:$0xf]
        %v2175 = vld [vmem:[%s4 + $0x60] sm:$0xf]
        %v2176 = vld [vmem:[%s4 + $0x64] sm:$0xf]
        %v2177 = vld [vmem:[%s4 + $0x68] sm:$0xf]
        %v2178 = vld [vmem:[%s4 + $0x6c] sm:$0xf]
        %v2179 = vld [vmem:[%s4 + $0x70] sm:$0xf]
        %v2180 = vld [vmem:[%s4 + $0x74] sm:$0xf]
        %v2181 = vld [vmem:[%s4 + $0x78] sm:$0xf]
        %v2182 = vld [vmem:[%s4 + $0x7c] sm:$0xf]
        %v2183 = vld [vmem:[%s5] sm:$0x1]
        %v2185 = vlaneseq
        %v2186 = vshrl.u32 %v2185, 7
        %v2187 = vsub.s32 0, %v2186
        %v2188 = vrot.slane %v2183, %v2187
        %v2222 = vunpack.c.l.b16 %v2151
        %v2223 = vunpack.c.l.b16 %v2152
        %v2224 = vunpack.c.l.b16 %v2153
        %v2225 = vunpack.c.l.b16 %v2154
        %v2226 = vunpack.c.l.b16 %v2155
        %v2227 = vunpack.c.l.b16 %v2156
        %v2228 = vunpack.c.l.b16 %v2157
        %v2229 = vunpack.c.l.b16 %v2158
        %v2230 = vunpack.c.l.b16 %v2159
        %v2231 = vunpack.c.l.b16 %v2160
        %v2232 = vunpack.c.l.b16 %v2161
        %v2233 = vunpack.c.l.b16 %v2162
        %v2234 = vunpack.c.l.b16 %v2163
        %v2235 = vunpack.c.l.b16 %v2164
        %v2236 = vunpack.c.l.b16 %v2165
        %v2237 = vunpack.c.l.b16 %v2166
        %v2238 = vunpack.c.l.b16 %v2167
        %v2239 = vunpack.c.l.b16 %v2168
        %v2240 = vunpack.c.l.b16 %v2169
        %v2241 = vunpack.c.l.b16 %v2170
        %v2242 = vunpack.c.l.b16 %v2171
        %v2243 = vunpack.c.l.b16 %v2172
        %v2244 = vunpack.c.l.b16 %v2173
        %v2245 = vunpack.c.l.b16 %v2174
        %v2246 = vunpack.c.l.b16 %v2175
        %v2247 = vunpack.c.l.b16 %v2176
        %v2248 = vunpack.c.l.b16 %v2177
        %v2249 = vunpack.c.l.b16 %v2178
        %v2250 = vunpack.c.l.b16 %v2179
        %v2251 = vunpack.c.l.b16 %v2180
        %v2252 = vunpack.c.l.b16 %v2181
        %v2253 = vunpack.c.l.b16 %v2182
        %v2254 = vpack.c.b16 %v2223, %v2222
        %v2255 = vpack.c.b16 %v2225, %v2224
        %v2256 = vpack.c.b16 %v2227, %v2226
        %v2257 = vpack.c.b16 %v2229, %v2228
        %v2258 = vpack.c.b16 %v2231, %v2230
        %v2259 = vpack.c.b16 %v2233, %v2232
        %v2260 = vpack.c.b16 %v2235, %v2234
        %v2261 = vpack.c.b16 %v2237, %v2236
        %v2262 = vpack.c.b16 %v2239, %v2238
        %v2263 = vpack.c.b16 %v2241, %v2240
        %v2264 = vpack.c.b16 %v2243, %v2242
        %v2265 = vpack.c.b16 %v2245, %v2244
        %v2266 = vpack.c.b16 %v2247, %v2246
        %v2267 = vpack.c.b16 %v2249, %v2248
        %v2268 = vpack.c.b16 %v2251, %v2250
        %v2269 = vpack.c.b16 %v2253, %v2252
        %2286 = vmatprep.subr.bf16.mxu0 0
        %2287 = vmatpush1.bf16.msra.mxu0 %v2261
        %2288 = vmatprep.subr.bf16.mxu0 0
        %2289 = vmatpush1.bf16.msra.mxu0 %v2260
        %2290 = vmatprep.subr.bf16.mxu0 0
        %2291 = vmatpush1.bf16.msra.mxu0 %v2259
        %2292 = vmatprep.subr.bf16.mxu0 0
        %2293 = vmatpush1.bf16.msra.mxu0 %v2258
        %2294 = vmatprep.subr.bf16.mxu0 0
        %2295 = vmatpush1.bf16.msra.mxu0 %v2257
        %2296 = vmatprep.subr.bf16.mxu0 0
        %2297 = vmatpush1.bf16.msra.mxu0 %v2256
        %2298 = vmatprep.subr.bf16.mxu0 0
        %2299 = vmatpush1.bf16.msra.mxu0 %v2255
        %2300 = vmatprep.subr.bf16.mxu0 0
        %2301 = vmatpush1.bf16.msra.mxu0 %v2254
        %2302 = vmatprep.subr.bf16.mxu0 0
        %2303 = vmatpush2.bf16.msra.mxu0 %v2269
        %2304 = vmatprep.subr.bf16.mxu0 0
        %2305 = vmatpush2.bf16.msra.mxu0 %v2268
        %2306 = vmatprep.subr.bf16.mxu0 0
        %2307 = vmatpush2.bf16.msra.mxu0 %v2267
        %2308 = vmatprep.subr.bf16.mxu0 0
        %2309 = vmatpush2.bf16.msra.mxu0 %v2266
        %2310 = vmatprep.subr.bf16.mxu0 0
        %2311 = vmatpush2.bf16.msra.mxu0 %v2265
        %2312 = vmatprep.subr.bf16.mxu0 0
        %2313 = vmatpush2.bf16.msra.mxu0 %v2264
        %2314 = vmatprep.subr.bf16.mxu0 0
        %2315 = vmatpush2.bf16.msra.mxu0 %v2263
        %2316 = vmatprep.subr.bf16.mxu0 0
        %2317 = vmatpush2.bf16.msra.mxu0 %v2262
        %2318 = vmatprep.mubr.bf16.mxu0 %v2120
        %2319 = vmatmul.mubr.bf16.gmra.mxu0 %v2119
        %v2320 = vpop.f32.mrf.mxu0
        %v2321 = vadd.f32 %v2188, %v2320
        %v2322 = vpop.f32.mrf.mxu0
        %v2323 = vpop.f32.mrf.mxu0
        %v2324 = vadd.f32 %v2188, %v2323
        %v2325 = vpop.f32.mrf.mxu0
        %2326 = vmatprep.mubr.bf16.mxu0 %v2122
        %2327 = vmatmul.mubr.bf16.gmra.mxu0 %v2121
        %v2328 = vpop.f32.mrf.mxu0
        %v2329 = vadd.f32 %v2188, %v2328
        %v2330 = vpop.f32.mrf.mxu0
        %v2331 = vpop.f32.mrf.mxu0
        %v2332 = vadd.f32 %v2188, %v2331
        %v2333 = vpop.f32.mrf.mxu0
        %2334 = vmatprep.mubr.bf16.mxu0 %v2124
        %2335 = vmatmul.mubr.bf16.gmra.mxu0 %v2123
        %v2336 = vpop.f32.mrf.mxu0
        %v2337 = vadd.f32 %v2188, %v2336
        %v2338 = vpop.f32.mrf.mxu0
        %v2339 = vpop.f32.mrf.mxu0
        %v2340 = vadd.f32 %v2188, %v2339
        %v2341 = vpop.f32.mrf.mxu0
        %2342 = vmatprep.mubr.bf16.mxu0 %v2126
        %2343 = vmatmul.mubr.bf16.gmra.mxu0 %v2125
        %v2344 = vpop.f32.mrf.mxu0
        %v2345 = vadd.f32 %v2188, %v2344
        %v2346 = vpop.f32.mrf.mxu0
        %v2347 = vpop.f32.mrf.mxu0
        %v2348 = vadd.f32 %v2188, %v2347
        %v2349 = vpop.f32.mrf.mxu0
        %2350 = vmatprep.mubr.bf16.mxu0 %v2128
        %2351 = vmatmul.mubr.bf16.gmra.mxu0 %v2127
        %v2352 = vpop.f32.mrf.mxu0
        %v2353 = vadd.f32 %v2188, %v2352
        %v2354 = vpop.f32.mrf.mxu0
        %v2355 = vpop.f32.mrf.mxu0
        %v2356 = vadd.f32 %v2188, %v2355
        %v2357 = vpop.f32.mrf.mxu0
        %2358 = vmatprep.mubr.bf16.mxu0 %v2130
        %2359 = vmatmul.mubr.bf16.gmra.mxu0 %v2129
        %v2360 = vpop.f32.mrf.mxu0
        %v2361 = vadd.f32 %v2188, %v2360
        %v2362 = vpop.f32.mrf.mxu0
        %v2363 = vpop.f32.mrf.mxu0
        %v2364 = vadd.f32 %v2188, %v2363
        %v2365 = vpop.f32.mrf.mxu0
        %2366 = vmatprep.mubr.bf16.mxu0 %v2132
        %2367 = vmatmul.mubr.bf16.gmra.mxu0 %v2131
        %v2368 = vpop.f32.mrf.mxu0
        %v2369 = vadd.f32 %v2188, %v2368
        %v2370 = vpop.f32.mrf.mxu0
        %v2371 = vpop.f32.mrf.mxu0
        %v2372 = vadd.f32 %v2188, %v2371
        %v2373 = vpop.f32.mrf.mxu0
        %2374 = vmatprep.mubr.bf16.mxu0 %v2134
        %2375 = vmatmul.mubr.bf16.gmra.mxu0 %v2133
        %v2376 = vpop.f32.mrf.mxu0
        %v2377 = vadd.f32 %v2188, %v2376
        %v2378 = vpop.f32.mrf.mxu0
        %v2379 = vpop.f32.mrf.mxu0
        %v2380 = vadd.f32 %v2188, %v2379
        %v2381 = vpop.f32.mrf.mxu0
        %2382 = vmatprep.mubr.bf16.mxu0 %v2136
        %2383 = vmatmul.mubr.bf16.gmra.mxu0 %v2135
        %v2384 = vpop.f32.mrf.mxu0
        %v2385 = vadd.f32 %v2188, %v2384
        %v2386 = vpop.f32.mrf.mxu0
        %v2387 = vpop.f32.mrf.mxu0
        %v2388 = vadd.f32 %v2188, %v2387
        %v2389 = vpop.f32.mrf.mxu0
        %2390 = vmatprep.mubr.bf16.mxu0 %v2138
        %2391 = vmatmul.mubr.bf16.gmra.mxu0 %v2137
        %v2392 = vpop.f32.mrf.mxu0
        %v2393 = vadd.f32 %v2188, %v2392
        %v2394 = vpop.f32.mrf.mxu0
        %v2395 = vpop.f32.mrf.mxu0
        %v2396 = vadd.f32 %v2188, %v2395
        %v2397 = vpop.f32.mrf.mxu0
        %2398 = vmatprep.mubr.bf16.mxu0 %v2140
        %2399 = vmatmul.mubr.bf16.gmra.mxu0 %v2139
        %v2400 = vpop.f32.mrf.mxu0
        %v2401 = vadd.f32 %v2188, %v2400
        %v2402 = vpop.f32.mrf.mxu0
        %v2403 = vpop.f32.mrf.mxu0
        %v2404 = vadd.f32 %v2188, %v2403
        %v2405 = vpop.f32.mrf.mxu0
        %2406 = vmatprep.mubr.bf16.mxu0 %v2142
        %2407 = vmatmul.mubr.bf16.gmra.mxu0 %v2141
        %v2408 = vpop.f32.mrf.mxu0
        %v2409 = vadd.f32 %v2188, %v2408
        %v2410 = vpop.f32.mrf.mxu0
        %v2411 = vpop.f32.mrf.mxu0
        %v2412 = vadd.f32 %v2188, %v2411
        %v2413 = vpop.f32.mrf.mxu0
        %2414 = vmatprep.mubr.bf16.mxu0 %v2144
        %2415 = vmatmul.mubr.bf16.gmra.mxu0 %v2143
        %v2416 = vpop.f32.mrf.mxu0
        %v2417 = vadd.f32 %v2188, %v2416
        %v2418 = vpop.f32.mrf.mxu0
        %v2419 = vpop.f32.mrf.mxu0
        %v2420 = vadd.f32 %v2188, %v2419
        %v2421 = vpop.f32.mrf.mxu0
        %2422 = vmatprep.mubr.bf16.mxu0 %v2146
        %2423 = vmatmul.mubr.bf16.gmra.mxu0 %v2145
        %v2424 = vpop.f32.mrf.mxu0
        %v2425 = vadd.f32 %v2188, %v2424
        %v2426 = vpop.f32.mrf.mxu0
        %v2427 = vpop.f32.mrf.mxu0
        %v2428 = vadd.f32 %v2188, %v2427
        %v2429 = vpop.f32.mrf.mxu0
        %2430 = vmatprep.mubr.bf16.mxu0 %v2148
        %2431 = vmatmul.mubr.bf16.gmra.mxu0 %v2147
        %v2432 = vpop.f32.mrf.mxu0
        %v2433 = vadd.f32 %v2188, %v2432
        %v2434 = vpop.f32.mrf.mxu0
        %v2435 = vpop.f32.mrf.mxu0
        %v2436 = vadd.f32 %v2188, %v2435
        %v2437 = vpop.f32.mrf.mxu0
        %2438 = vmatprep.mubr.bf16.mxu0 %v2150
        %2439 = vmatmul.mubr.bf16.gmra.mxu0 %v2149
        %v2440 = vpop.f32.mrf.mxu0
        %v2441 = vadd.f32 %v2188, %v2440
        %v2442 = vpop.f32.mrf.mxu0
        %v2443 = vpop.f32.mrf.mxu0
        %v2444 = vadd.f32 %v2188, %v2443
        %v2445 = vpop.f32.mrf.mxu0
        %2446 = vdwg.mxu0
        %2447 = vst [vmem:[%s258] sm:$0xff] %v2321
        %2448 = vst [vmem:[%s258 + $0x8] sm:$0xff] %v2324
        %2449 = vst [vmem:[%s258 + $0x10] sm:$0xff] %v2329
        %2450 = vst [vmem:[%s258 + $0x18] sm:$0xff] %v2332
        %2451 = vst [vmem:[%s258 + $0x20] sm:$0xff] %v2337
        %2452 = vst [vmem:[%s258 + $0x28] sm:$0xff] %v2340
        %2453 = vst [vmem:[%s258 + $0x30] sm:$0xff] %v2345
        %2454 = vst [vmem:[%s258 + $0x38] sm:$0xff] %v2348
        %2455 = vst [vmem:[%s258 + $0x40] sm:$0xff] %v2353
        %2456 = vst [vmem:[%s258 + $0x48] sm:$0xff] %v2356
        %2457 = vst [vmem:[%s258 + $0x50] sm:$0xff] %v2361
        %2458 = vst [vmem:[%s258 + $0x58] sm:$0xff] %v2364
        %2459 = vst [vmem:[%s258 + $0x60] sm:$0xff] %v2369
        %2460 = vst [vmem:[%s258 + $0x68] sm:$0xff] %v2372
        %2461 = vst [vmem:[%s258 + $0x70] sm:$0xff] %v2377
        %2462 = vst [vmem:[%s258 + $0x78] sm:$0xff] %v2380
        %2463 = vst [vmem:[%s258 + $0x80] sm:$0xff] %v2385
        %2464 = vst [vmem:[%s258 + $0x88] sm:$0xff] %v2388
        %2465 = vst [vmem:[%s258 + $0x90] sm:$0xff] %v2393
        %2466 = vst [vmem:[%s258 + $0x98] sm:$0xff] %v2396
        %2467 = vst [vmem:[%s258 + $0xa0] sm:$0xff] %v2401
        %2468 = vst [vmem:[%s258 + $0xa8] sm:$0xff] %v2404
        %2469 = vst [vmem:[%s258 + $0xb0] sm:$0xff] %v2409
        %2470 = vst [vmem:[%s258 + $0xb8] sm:$0xff] %v2412
        %2471 = vst [vmem:[%s258 + $0xc0] sm:$0xff] %v2417
        %2472 = vst [vmem:[%s258 + $0xc8] sm:$0xff] %v2420
        %2473 = vst [vmem:[%s258 + $0xd0] sm:$0xff] %v2425
        %2474 = vst [vmem:[%s258 + $0xd8] sm:$0xff] %v2428
        %2475 = vst [vmem:[%s258 + $0xe0] sm:$0xff] %v2433
        %2476 = vst [vmem:[%s258 + $0xe8] sm:$0xff] %v2436
        %2477 = vst [vmem:[%s258 + $0xf0] sm:$0xff] %v2441
        %2478 = vst [vmem:[%s258 + $0xf8] sm:$0xff] %v2444
        %s2479 = sand.u32 %s173, 1
        %s2480 = scalar_lea.sflag [#allocation3], %s2479
        %s2481 = sand.u32 %s173, 1
        %s2482 = smul.addr %s2481, 256
        %s2483 = scalar_lea.vmem [#allocation2], %s2482
        // Predicated region
        $region45: #{tpu_custom_call.1} parent=43 // pred_check
          %p2484 = pneg %p183
        $region46: #{tpu_custom_call.1} parent=43 // pred_check_branch
          %2486 = sbr.rel (%p2484) target = $region48
        $region47: #{tpu_custom_call.1} parent=43 // pred_region
          %s2487 = smul.u32 16, %s25
          %s2489 = ssub.s32 4096, 4096
          %2490 = vsyncadd %s2480, %s2489
          %s2491 = smul.addr %s2487, 2
          %s2492 = smul.addr %s24, 32
          %s2493 = sadd.s32 %s2491, %s2492
          %s2494 = smul.addr %s2493, 128
          %s2495 = scalar_lea.hbm %s6, %s2494
          %s2496 = sshll.u32 %s2483, 4
          %s2497 = int_to_ptr.vmem [resolvable:$true] %s2496
          %2502 = dma.vmem_to_hbm [thread:$0]  %s2497, 4096, %s2495, %s2480, 128, 128, 8
        $region48: #{tpu_custom_call.1} parent=43 // pred_fallthru
          _
      $region44: #{tpu_custom_call.1} parent=5 // pred_fallthru
        _
      %p2503 = scmp.le.s32.totalorder 2, %s15
      // Predicated region
      $region49: #{tpu_custom_call.1} parent=5 // pred_check
        %p2504 = pneg %p2503
      $region50: #{tpu_custom_call.1} parent=5 // pred_check_branch
        %2506 = sbr.rel (%p2504) target = $region52
      $region51: #{tpu_custom_call.1} parent=5 // pred_region
        %s2507 = ssub.s32 %s15, 2
        // Predicated region
        $region53: #{tpu_custom_call.1} parent=51 // pred_check
          %p2508 = pneg %p189
        $region54: #{tpu_custom_call.1} parent=51 // pred_check_branch
          %2510 = sbr.rel (%p2508) target = $region56
        $region55: #{tpu_custom_call.1} parent=51 // pred_region
          %s2511 = sand.u32 %s174, 1
          %s2512 = scalar_lea.sflag [#allocation3], %s2511
          %s2513 = sand.u32 %s174, 1
          %s2514 = smul.addr %s2513, 256
          %s2515 = scalar_lea.vmem [#allocation2], %s2514
          %2516 = dma.done %s2512, 4096
        $region56: #{tpu_custom_call.1} parent=51 // pred_fallthru
          _
      $region52: #{tpu_custom_call.1} parent=5 // pred_fallthru
        _
    $region6: #{tpu_custom_call.1} parent=1 // loop_footer
      %s19 = sadd.s32 1, %s15
    $region7: #{tpu_custom_call.1} parent=1 // loop_footer_branch
      %14 = sbr.rel target = $region3
    $region8: #{tpu_custom_call.1} parent=1 // loop_exit
      _
    %2517 = vsyncpa [#allocation3], 1
    %s2518 = scalar_lea.sflag [#allocation3], 1
    %2519 = vsyncpa %s2518, 1

</llo_original>
